<compile_context>
chip_gen: v5e
topology: v5e:2x2
jax: 0.10.0
libtpu: 0.0.40
codegen_flags: <defaults>
</compile_context>

<pallas_src>
import jax
import jax.numpy as jnp
from jax.experimental import pallas as pl
from jax.experimental.pallas import tpu as pltpu

LAYERS = [1, 50, 50, 50, 50, 50, 50, 50, 50, 50, 50, 50, 50, 1]
NUM_LAYERS = len(LAYERS) - 1     # 13 linear layers
FP = 64                          # padded hidden width (sublanes, multiple of 8)
IN_SUB = 8                       # sublane rows carried for the scalar in/out
MAX_TB = 1024                    # cap on batch tile (lanes)


def mlp_kernel(x_ref, w_ref, b_ref, o_ref):
    """Full 13-layer MLP on one batch tile; batch on lanes, features on sublanes.

    x_ref: (IN_SUB, TB)        row 0 = real scalar inputs, rows 1.. are zero
    w_ref: (L, FP, FP)         zero-padded transposed weights: w_ref[l] = W_l^T
    b_ref: (L, FP, 1)          zero-padded biases (column vectors)
    o_ref: (IN_SUB, TB)        row 0 = real scalar outputs
    """
    tb = x_ref.shape[1]

    # ---- layer 0 (fan_in = 1): outer product on the VPU ------------------
    # W_0^T is the first (and only non-zero) column of w_ref[0].
    x_row = jnp.broadcast_to(x_ref[0:1, :].astype(jnp.float32), (FP, tb))
    w0_col = jnp.broadcast_to(w_ref[0][:, 0:1], (FP, tb))
    h = jnp.tanh(w0_col * x_row + b_ref[0])                        # (FP, TB)

    # ---- hidden layers 1..L-2: uniform (FP,FP)x(FP,TB) MXU matmuls -------
    for l in range(1, NUM_LAYERS - 1):                             # static unroll
        h = jnp.tanh(
            jnp.dot(w_ref[l], h, preferred_element_type=jnp.float32) + b_ref[l])

    # ---- last layer (fan_out = 1): only the IN_SUB stored sublanes -------
    w_last = w_ref[NUM_LAYERS - 1][:IN_SUB, :]                     # (IN_SUB, FP)
    b_last = b_ref[NUM_LAYERS - 1][:IN_SUB, :]                     # (IN_SUB, 1)
    out = jnp.dot(w_last, h, preferred_element_type=jnp.float32) + b_last
    o_ref[...] = out.astype(o_ref.dtype)


def _pick_tile(n):
    """Largest power-of-two batch tile <= MAX_TB that still yields >=2 grid
    steps (keeps both v7x TensorCores busy); floor at 128 lanes."""
    tb = MAX_TB
    while tb > 128 and (n + tb - 1) // tb < 2:
        tb //= 2
    return tb


@jax.jit
def dnn_forward(x, wt_stack, b_stack):
    """x: (N, 1) float32 -> (N, 1) float32, same math as the PyTorch DNN."""
    n = x.shape[0]
    tb = _pick_tile(n)
    nb = (n + tb - 1) // tb
    n_pad = nb * tb

    # transposed, lane-dense input: batch on lanes, 8 sublanes (row 0 is real)
    x_p = jnp.zeros((IN_SUB, n_pad), jnp.float32).at[0, :n].set(x[:, 0])

    out_p = pl.pallas_call(
        mlp_kernel,
        out_shape=jax.ShapeDtypeStruct((IN_SUB, n_pad), jnp.float32),
        grid_spec=pltpu.PrefetchScalarGridSpec(
            num_scalar_prefetch=0,
            grid=(nb,),
            in_specs=[
                pl.BlockSpec((IN_SUB, tb), lambda i: (0, i)),
                # constant index maps: weights/biases fetched once, stay
                # resident in VMEM across all batch tiles
                pl.BlockSpec((NUM_LAYERS, FP, FP), lambda i: (0, 0, 0)),
                pl.BlockSpec((NUM_LAYERS, FP, 1), lambda i: (0, 0, 0)),
            ],
            out_specs=pl.BlockSpec((IN_SUB, tb), lambda i: (0, i)),
        ),
        compiler_params=pltpu.CompilerParams(
            dimension_semantics=("parallel",)),
    )(x_p, wt_stack, b_stack)

    return out_p[0, :n][:, None]


def init_params(key):
    """Deterministic init mimicking torch.nn.Linear (U(-1/sqrt(fan_in), +)),
    packed into the transposed, zero-padded stacks used by the kernel."""
    wt_stack = jnp.zeros((NUM_LAYERS, FP, FP), jnp.float32)   # [l] = W_l^T padded
    b_stack = jnp.zeros((NUM_LAYERS, FP, 1), jnp.float32)
    for l in range(NUM_LAYERS):
        fan_in, fan_out = LAYERS[l], LAYERS[l + 1]
        key, kw, kb = jax.random.split(key, 3)
        bound = 1.0 / jnp.sqrt(fan_in)
        w = jax.random.uniform(kw, (fan_in, fan_out), jnp.float32, -bound, bound)
        b = jax.random.uniform(kb, (fan_out,), jnp.float32, -bound, bound)
        wt_stack = wt_stack.at[l, :fan_out, :fan_in].set(w.T)
        b_stack = b_stack.at[l, :fan_out, 0].set(b)
    return wt_stack, b_stack


def reference_forward(x, wt_stack, b_stack):
    """Plain-JAX reference of the same MLP (for checking)."""
    h = x
    for l in range(NUM_LAYERS):
        fan_in, fan_out = LAYERS[l], LAYERS[l + 1]
        w_t = wt_stack[l, :fan_out, :fan_in]       # (out, in)
        b = b_stack[l, :fan_out, 0]
        h = h @ w_t.T + b
        if l < NUM_LAYERS - 1:
            h = jnp.tanh(h)
    return h


if __name__ == "__main__":
    key = jax.random.PRNGKey(0)
    k_params, k_x = jax.random.split(key)
    wt_stack, b_stack = init_params(k_params)

    # small example input consistent with the module: (N, 1)
    N = 256
    x = jax.random.uniform(k_x, (N, 1), jnp.float32, -1.0, 1.0)

    out = jax.block_until_ready(dnn_forward(x, wt_stack, b_stack))
    ref = reference_forward(x, wt_stack, b_stack)

    assert out.shape == (N, 1)
    max_err = float(jnp.max(jnp.abs(out - ref)))
    assert jnp.allclose(out, ref, atol=2e-5, rtol=1e-5), max_err

    print("KERNEL_OK")
</pallas_src>

<mosaic_0001>
module attributes {stable_mosaic.version = 11 : i64} {
  func.func @mlp_kernel(%arg0: i32, %arg1: memref<8x128xf32, #tpu.memory_space<vmem>>, %arg2: memref<13x64x64xf32, #tpu.memory_space<vmem>>, %arg3: memref<13x64x1xf32, #tpu.memory_space<vmem>>, %arg4: memref<8x128xf32, #tpu.memory_space<vmem>>) attributes {dimension_semantics = [#tpu.dimension_semantics<parallel>], iteration_bounds = array<i64: 2>, scalar_prefetch = 0 : i64, scratch_operands = 0 : i64, tpu.core_type = #tpu.core_type<tc>, window_params = [{transform_indices = @transform_0, window_bounds = array<i64: 8, 128>}, {pipeline_mode = #tpu.pipeline_mode<synchronous>, transform_indices = @transform_1, window_bounds = array<i64: 13, 64, 64>}, {pipeline_mode = #tpu.pipeline_mode<synchronous>, transform_indices = @transform_2, window_bounds = array<i64: 13, 64, 1>}, {transform_indices = @transform_3, window_bounds = array<i64: 8, 128>}]} {
    %c0 = arith.constant 0 : index
    %c0_0 = arith.constant 0 : index
    %0 = vector.load %arg1[%c0, %c0_0] : memref<8x128xf32, #tpu.memory_space<vmem>>, vector<1x128xf32>
    %1 = vector.shape_cast %0 : vector<1x128xf32> to vector<1x128xf32>
    %2 = vector.broadcast %1 : vector<1x128xf32> to vector<64x128xf32>
    %c0_1 = arith.constant 0 : index
    %c0_2 = arith.constant 0 : index
    %c0_3 = arith.constant 0 : index
    %3 = vector.load %arg2[%c0_1, %c0_2, %c0_3] : memref<13x64x64xf32, #tpu.memory_space<vmem>>, vector<1x64x64xf32>
    %4 = vector.shape_cast %3 : vector<1x64x64xf32> to vector<64x64xf32>
    %5 = vector.extract_strided_slice %4 {offsets = [0, 0], sizes = [64, 1], strides = [1, 1]} : vector<64x64xf32> to vector<64x1xf32>
    %6 = vector.shape_cast %5 : vector<64x1xf32> to vector<64x1xf32>
    %7 = vector.broadcast %6 : vector<64x1xf32> to vector<64x128xf32>
    %8 = arith.mulf %7, %2 : vector<64x128xf32>
    %c0_4 = arith.constant 0 : index
    %c0_5 = arith.constant 0 : index
    %c0_6 = arith.constant 0 : index
    %9 = vector.load %arg3[%c0_4, %c0_5, %c0_6] : memref<13x64x1xf32, #tpu.memory_space<vmem>>, vector<1x64x1xf32>
    %10 = vector.shape_cast %9 : vector<1x64x1xf32> to vector<64x1xf32>
    %11 = vector.broadcast %10 : vector<64x1xf32> to vector<64x128xf32>
    %12 = arith.addf %8, %11 : vector<64x128xf32>
    %13 = math.tanh %12 : vector<64x128xf32>
    %c1 = arith.constant 1 : index
    %c0_7 = arith.constant 0 : index
    %c0_8 = arith.constant 0 : index
    %14 = vector.load %arg2[%c1, %c0_7, %c0_8] : memref<13x64x64xf32, #tpu.memory_space<vmem>>, vector<1x64x64xf32>
    %15 = vector.shape_cast %14 : vector<1x64x64xf32> to vector<64x64xf32>
    %cst = arith.constant dense<0.000000e+00> : vector<64x128xf32>
    %16 = tpu.matmul %15, %13, %cst {dimension_numbers = #tpu.dot_dimension_numbers<[1], [0], [0], [1], [0, 0, 1, 1], [], []>} : vector<64x64xf32>, vector<64x128xf32>, vector<64x128xf32> -> vector<64x128xf32>
    %c1_9 = arith.constant 1 : index
    %c0_10 = arith.constant 0 : index
    %c0_11 = arith.constant 0 : index
    %17 = vector.load %arg3[%c1_9, %c0_10, %c0_11] : memref<13x64x1xf32, #tpu.memory_space<vmem>>, vector<1x64x1xf32>
    %18 = vector.shape_cast %17 : vector<1x64x1xf32> to vector<64x1xf32>
    %19 = vector.broadcast %18 : vector<64x1xf32> to vector<64x128xf32>
    %20 = arith.addf %16, %19 : vector<64x128xf32>
    %21 = math.tanh %20 : vector<64x128xf32>
    %c2 = arith.constant 2 : index
    %c0_12 = arith.constant 0 : index
    %c0_13 = arith.constant 0 : index
    %22 = vector.load %arg2[%c2, %c0_12, %c0_13] : memref<13x64x64xf32, #tpu.memory_space<vmem>>, vector<1x64x64xf32>
    %23 = vector.shape_cast %22 : vector<1x64x64xf32> to vector<64x64xf32>
    %cst_14 = arith.constant dense<0.000000e+00> : vector<64x128xf32>
    %24 = tpu.matmul %23, %21, %cst_14 {dimension_numbers = #tpu.dot_dimension_numbers<[1], [0], [0], [1], [0, 0, 1, 1], [], []>} : vector<64x64xf32>, vector<64x128xf32>, vector<64x128xf32> -> vector<64x128xf32>
    %c2_15 = arith.constant 2 : index
    %c0_16 = arith.constant 0 : index
    %c0_17 = arith.constant 0 : index
    %25 = vector.load %arg3[%c2_15, %c0_16, %c0_17] : memref<13x64x1xf32, #tpu.memory_space<vmem>>, vector<1x64x1xf32>
    %26 = vector.shape_cast %25 : vector<1x64x1xf32> to vector<64x1xf32>
    %27 = vector.broadcast %26 : vector<64x1xf32> to vector<64x128xf32>
    %28 = arith.addf %24, %27 : vector<64x128xf32>
    %29 = math.tanh %28 : vector<64x128xf32>
    %c3 = arith.constant 3 : index
    %c0_18 = arith.constant 0 : index
    %c0_19 = arith.constant 0 : index
    %30 = vector.load %arg2[%c3, %c0_18, %c0_19] : memref<13x64x64xf32, #tpu.memory_space<vmem>>, vector<1x64x64xf32>
    %31 = vector.shape_cast %30 : vector<1x64x64xf32> to vector<64x64xf32>
    %cst_20 = arith.constant dense<0.000000e+00> : vector<64x128xf32>
    %32 = tpu.matmul %31, %29, %cst_20 {dimension_numbers = #tpu.dot_dimension_numbers<[1], [0], [0], [1], [0, 0, 1, 1], [], []>} : vector<64x64xf32>, vector<64x128xf32>, vector<64x128xf32> -> vector<64x128xf32>
    %c3_21 = arith.constant 3 : index
    %c0_22 = arith.constant 0 : index
    %c0_23 = arith.constant 0 : index
    %33 = vector.load %arg3[%c3_21, %c0_22, %c0_23] : memref<13x64x1xf32, #tpu.memory_space<vmem>>, vector<1x64x1xf32>
    %34 = vector.shape_cast %33 : vector<1x64x1xf32> to vector<64x1xf32>
    %35 = vector.broadcast %34 : vector<64x1xf32> to vector<64x128xf32>
    %36 = arith.addf %32, %35 : vector<64x128xf32>
    %37 = math.tanh %36 : vector<64x128xf32>
    %c4 = arith.constant 4 : index
    %c0_24 = arith.constant 0 : index
    %c0_25 = arith.constant 0 : index
    %38 = vector.load %arg2[%c4, %c0_24, %c0_25] : memref<13x64x64xf32, #tpu.memory_space<vmem>>, vector<1x64x64xf32>
    %39 = vector.shape_cast %38 : vector<1x64x64xf32> to vector<64x64xf32>
    %cst_26 = arith.constant dense<0.000000e+00> : vector<64x128xf32>
    %40 = tpu.matmul %39, %37, %cst_26 {dimension_numbers = #tpu.dot_dimension_numbers<[1], [0], [0], [1], [0, 0, 1, 1], [], []>} : vector<64x64xf32>, vector<64x128xf32>, vector<64x128xf32> -> vector<64x128xf32>
    %c4_27 = arith.constant 4 : index
    %c0_28 = arith.constant 0 : index
    %c0_29 = arith.constant 0 : index
    %41 = vector.load %arg3[%c4_27, %c0_28, %c0_29] : memref<13x64x1xf32, #tpu.memory_space<vmem>>, vector<1x64x1xf32>
    %42 = vector.shape_cast %41 : vector<1x64x1xf32> to vector<64x1xf32>
    %43 = vector.broadcast %42 : vector<64x1xf32> to vector<64x128xf32>
    %44 = arith.addf %40, %43 : vector<64x128xf32>
    %45 = math.tanh %44 : vector<64x128xf32>
    %c5 = arith.constant 5 : index
    %c0_30 = arith.constant 0 : index
    %c0_31 = arith.constant 0 : index
    %46 = vector.load %arg2[%c5, %c0_30, %c0_31] : memref<13x64x64xf32, #tpu.memory_space<vmem>>, vector<1x64x64xf32>
    %47 = vector.shape_cast %46 : vector<1x64x64xf32> to vector<64x64xf32>
    %cst_32 = arith.constant dense<0.000000e+00> : vector<64x128xf32>
    %48 = tpu.matmul %47, %45, %cst_32 {dimension_numbers = #tpu.dot_dimension_numbers<[1], [0], [0], [1], [0, 0, 1, 1], [], []>} : vector<64x64xf32>, vector<64x128xf32>, vector<64x128xf32> -> vector<64x128xf32>
    %c5_33 = arith.constant 5 : index
    %c0_34 = arith.constant 0 : index
    %c0_35 = arith.constant 0 : index
    %49 = vector.load %arg3[%c5_33, %c0_34, %c0_35] : memref<13x64x1xf32, #tpu.memory_space<vmem>>, vector<1x64x1xf32>
    %50 = vector.shape_cast %49 : vector<1x64x1xf32> to vector<64x1xf32>
    %51 = vector.broadcast %50 : vector<64x1xf32> to vector<64x128xf32>
    %52 = arith.addf %48, %51 : vector<64x128xf32>
    %53 = math.tanh %52 : vector<64x128xf32>
    %c6 = arith.constant 6 : index
    %c0_36 = arith.constant 0 : index
    %c0_37 = arith.constant 0 : index
    %54 = vector.load %arg2[%c6, %c0_36, %c0_37] : memref<13x64x64xf32, #tpu.memory_space<vmem>>, vector<1x64x64xf32>
    %55 = vector.shape_cast %54 : vector<1x64x64xf32> to vector<64x64xf32>
    %cst_38 = arith.constant dense<0.000000e+00> : vector<64x128xf32>
    %56 = tpu.matmul %55, %53, %cst_38 {dimension_numbers = #tpu.dot_dimension_numbers<[1], [0], [0], [1], [0, 0, 1, 1], [], []>} : vector<64x64xf32>, vector<64x128xf32>, vector<64x128xf32> -> vector<64x128xf32>
    %c6_39 = arith.constant 6 : index
    %c0_40 = arith.constant 0 : index
    %c0_41 = arith.constant 0 : index
    %57 = vector.load %arg3[%c6_39, %c0_40, %c0_41] : memref<13x64x1xf32, #tpu.memory_space<vmem>>, vector<1x64x1xf32>
    %58 = vector.shape_cast %57 : vector<1x64x1xf32> to vector<64x1xf32>
    %59 = vector.broadcast %58 : vector<64x1xf32> to vector<64x128xf32>
    %60 = arith.addf %56, %59 : vector<64x128xf32>
    %61 = math.tanh %60 : vector<64x128xf32>
    %c7 = arith.constant 7 : index
    %c0_42 = arith.constant 0 : index
    %c0_43 = arith.constant 0 : index
    %62 = vector.load %arg2[%c7, %c0_42, %c0_43] : memref<13x64x64xf32, #tpu.memory_space<vmem>>, vector<1x64x64xf32>
    %63 = vector.shape_cast %62 : vector<1x64x64xf32> to vector<64x64xf32>
    %cst_44 = arith.constant dense<0.000000e+00> : vector<64x128xf32>
    %64 = tpu.matmul %63, %61, %cst_44 {dimension_numbers = #tpu.dot_dimension_numbers<[1], [0], [0], [1], [0, 0, 1, 1], [], []>} : vector<64x64xf32>, vector<64x128xf32>, vector<64x128xf32> -> vector<64x128xf32>
    %c7_45 = arith.constant 7 : index
    %c0_46 = arith.constant 0 : index
    %c0_47 = arith.constant 0 : index
    %65 = vector.load %arg3[%c7_45, %c0_46, %c0_47] : memref<13x64x1xf32, #tpu.memory_space<vmem>>, vector<1x64x1xf32>
    %66 = vector.shape_cast %65 : vector<1x64x1xf32> to vector<64x1xf32>
    %67 = vector.broadcast %66 : vector<64x1xf32> to vector<64x128xf32>
    %68 = arith.addf %64, %67 : vector<64x128xf32>
    %69 = math.tanh %68 : vector<64x128xf32>
    %c8 = arith.constant 8 : index
    %c0_48 = arith.constant 0 : index
    %c0_49 = arith.constant 0 : index
    %70 = vector.load %arg2[%c8, %c0_48, %c0_49] : memref<13x64x64xf32, #tpu.memory_space<vmem>>, vector<1x64x64xf32>
    %71 = vector.shape_cast %70 : vector<1x64x64xf32> to vector<64x64xf32>
    %cst_50 = arith.constant dense<0.000000e+00> : vector<64x128xf32>
    %72 = tpu.matmul %71, %69, %cst_50 {dimension_numbers = #tpu.dot_dimension_numbers<[1], [0], [0], [1], [0, 0, 1, 1], [], []>} : vector<64x64xf32>, vector<64x128xf32>, vector<64x128xf32> -> vector<64x128xf32>
    %c8_51 = arith.constant 8 : index
    %c0_52 = arith.constant 0 : index
    %c0_53 = arith.constant 0 : index
    %73 = vector.load %arg3[%c8_51, %c0_52, %c0_53] : memref<13x64x1xf32, #tpu.memory_space<vmem>>, vector<1x64x1xf32>
    %74 = vector.shape_cast %73 : vector<1x64x1xf32> to vector<64x1xf32>
    %75 = vector.broadcast %74 : vector<64x1xf32> to vector<64x128xf32>
    %76 = arith.addf %72, %75 : vector<64x128xf32>
    %77 = math.tanh %76 : vector<64x128xf32>
    %c9 = arith.constant 9 : index
    %c0_54 = arith.constant 0 : index
    %c0_55 = arith.constant 0 : index
    %78 = vector.load %arg2[%c9, %c0_54, %c0_55] : memref<13x64x64xf32, #tpu.memory_space<vmem>>, vector<1x64x64xf32>
    %79 = vector.shape_cast %78 : vector<1x64x64xf32> to vector<64x64xf32>
    %cst_56 = arith.constant dense<0.000000e+00> : vector<64x128xf32>
    %80 = tpu.matmul %79, %77, %cst_56 {dimension_numbers = #tpu.dot_dimension_numbers<[1], [0], [0], [1], [0, 0, 1, 1], [], []>} : vector<64x64xf32>, vector<64x128xf32>, vector<64x128xf32> -> vector<64x128xf32>
    %c9_57 = arith.constant 9 : index
    %c0_58 = arith.constant 0 : index
    %c0_59 = arith.constant 0 : index
    %81 = vector.load %arg3[%c9_57, %c0_58, %c0_59] : memref<13x64x1xf32, #tpu.memory_space<vmem>>, vector<1x64x1xf32>
    %82 = vector.shape_cast %81 : vector<1x64x1xf32> to vector<64x1xf32>
    %83 = vector.broadcast %82 : vector<64x1xf32> to vector<64x128xf32>
    %84 = arith.addf %80, %83 : vector<64x128xf32>
    %85 = math.tanh %84 : vector<64x128xf32>
    %c10 = arith.constant 10 : index
    %c0_60 = arith.constant 0 : index
    %c0_61 = arith.constant 0 : index
    %86 = vector.load %arg2[%c10, %c0_60, %c0_61] : memref<13x64x64xf32, #tpu.memory_space<vmem>>, vector<1x64x64xf32>
    %87 = vector.shape_cast %86 : vector<1x64x64xf32> to vector<64x64xf32>
    %cst_62 = arith.constant dense<0.000000e+00> : vector<64x128xf32>
    %88 = tpu.matmul %87, %85, %cst_62 {dimension_numbers = #tpu.dot_dimension_numbers<[1], [0], [0], [1], [0, 0, 1, 1], [], []>} : vector<64x64xf32>, vector<64x128xf32>, vector<64x128xf32> -> vector<64x128xf32>
    %c10_63 = arith.constant 10 : index
    %c0_64 = arith.constant 0 : index
    %c0_65 = arith.constant 0 : index
    %89 = vector.load %arg3[%c10_63, %c0_64, %c0_65] : memref<13x64x1xf32, #tpu.memory_space<vmem>>, vector<1x64x1xf32>
    %90 = vector.shape_cast %89 : vector<1x64x1xf32> to vector<64x1xf32>
    %91 = vector.broadcast %90 : vector<64x1xf32> to vector<64x128xf32>
    %92 = arith.addf %88, %91 : vector<64x128xf32>
    %93 = math.tanh %92 : vector<64x128xf32>
    %c11 = arith.constant 11 : index
    %c0_66 = arith.constant 0 : index
    %c0_67 = arith.constant 0 : index
    %94 = vector.load %arg2[%c11, %c0_66, %c0_67] : memref<13x64x64xf32, #tpu.memory_space<vmem>>, vector<1x64x64xf32>
    %95 = vector.shape_cast %94 : vector<1x64x64xf32> to vector<64x64xf32>
    %cst_68 = arith.constant dense<0.000000e+00> : vector<64x128xf32>
    %96 = tpu.matmul %95, %93, %cst_68 {dimension_numbers = #tpu.dot_dimension_numbers<[1], [0], [0], [1], [0, 0, 1, 1], [], []>} : vector<64x64xf32>, vector<64x128xf32>, vector<64x128xf32> -> vector<64x128xf32>
    %c11_69 = arith.constant 11 : index
    %c0_70 = arith.constant 0 : index
    %c0_71 = arith.constant 0 : index
    %97 = vector.load %arg3[%c11_69, %c0_70, %c0_71] : memref<13x64x1xf32, #tpu.memory_space<vmem>>, vector<1x64x1xf32>
    %98 = vector.shape_cast %97 : vector<1x64x1xf32> to vector<64x1xf32>
    %99 = vector.broadcast %98 : vector<64x1xf32> to vector<64x128xf32>
    %100 = arith.addf %96, %99 : vector<64x128xf32>
    %101 = math.tanh %100 : vector<64x128xf32>
    %c12 = arith.constant 12 : index
    %c0_72 = arith.constant 0 : index
    %c0_73 = arith.constant 0 : index
    %102 = vector.load %arg2[%c12, %c0_72, %c0_73] : memref<13x64x64xf32, #tpu.memory_space<vmem>>, vector<1x64x64xf32>
    %103 = vector.shape_cast %102 : vector<1x64x64xf32> to vector<64x64xf32>
    %104 = vector.extract_strided_slice %103 {offsets = [0, 0], sizes = [8, 64], strides = [1, 1]} : vector<64x64xf32> to vector<8x64xf32>
    %c12_74 = arith.constant 12 : index
    %c0_75 = arith.constant 0 : index
    %c0_76 = arith.constant 0 : index
    %105 = vector.load %arg3[%c12_74, %c0_75, %c0_76] : memref<13x64x1xf32, #tpu.memory_space<vmem>>, vector<1x64x1xf32>
    %106 = vector.shape_cast %105 : vector<1x64x1xf32> to vector<64x1xf32>
    %107 = vector.extract_strided_slice %106 {offsets = [0, 0], sizes = [8, 1], strides = [1, 1]} : vector<64x1xf32> to vector<8x1xf32>
    %cst_77 = arith.constant dense<0.000000e+00> : vector<8x128xf32>
    %108 = tpu.matmul %104, %101, %cst_77 {dimension_numbers = #tpu.dot_dimension_numbers<[1], [0], [0], [1], [0, 0, 1, 1], [], []>} : vector<8x64xf32>, vector<64x128xf32>, vector<8x128xf32> -> vector<8x128xf32>
    %109 = vector.broadcast %107 : vector<8x1xf32> to vector<8x128xf32>
    %110 = arith.addf %108, %109 : vector<8x128xf32>
    %c0_78 = arith.constant 0 : index
    %c0_79 = arith.constant 0 : index
    %111 = vector.load %arg4[%c0_78, %c0_79] : memref<8x128xf32, #tpu.memory_space<vmem>>, vector<8x128xf32>
    tpu.vector_store %arg4[%c0_78, %c0_79], %110 {strides = array<i32>} : memref<8x128xf32, #tpu.memory_space<vmem>>, vector<8x128xf32>,
    return
  }
  func.func @transform_0(%arg0: i32) -> (i32, i32) {
    %c0_i32 = arith.constant 0 : i32
    %c0_i32_0 = arith.constant 0 : i32
    return %c0_i32, %arg0 : i32, i32
  }
  func.func @transform_1(%arg0: i32) -> (i32, i32, i32) {
    %c0_i32 = arith.constant 0 : i32
    %c0_i32_0 = arith.constant 0 : i32
    %c0_i32_1 = arith.constant 0 : i32
    %c0_i32_2 = arith.constant 0 : i32
    return %c0_i32, %c0_i32_0, %c0_i32_1 : i32, i32, i32
  }
  func.func @transform_2(%arg0: i32) -> (i32, i32, i32) {
    %c0_i32 = arith.constant 0 : i32
    %c0_i32_0 = arith.constant 0 : i32
    %c0_i32_1 = arith.constant 0 : i32
    %c0_i32_2 = arith.constant 0 : i32
    return %c0_i32, %c0_i32_0, %c0_i32_1 : i32, i32, i32
  }
  func.func @transform_3(%arg0: i32) -> (i32, i32) {
    %c0_i32 = arith.constant 0 : i32
    %c0_i32_0 = arith.constant 0 : i32
    return %c0_i32, %arg0 : i32, i32
  }
}

</mosaic_0001>

<llo_original>
// kernel: dnn_forward.1
$region0: #{dnn_forward.1}
  #allocation0 [shape = 'u32[]', space=smem, size = 0x4, offset = 0x4, fixed_abs, tag = 'smem constant byte address 0x4 - core index']
  #allocation1 [shape = 'u32[72,128]{1,0:T(1,128)}', space=vmem, size = 0x9000, scoped, tag = 'internal scratch']
  %s0 = inlined_call_operand.vmem [shape: f32[8,256], index: 0, kind: input, shape index: {}]
  %s1 = inlined_call_operand.vmem [shape: f32[13,64,64], index: 1, kind: input, shape index: {}]
  %s2 = inlined_call_operand.vmem [shape: f32[13,64,1], index: 2, kind: input, shape index: {}]
  %s3 = inlined_call_operand.vmem [shape: f32[8,256], index: 3, kind: output, shape index: {}]
  %s4 = sld [smem:[#allocation0]]
  $region45: #{dnn_forward.1} parent=0
    _
  %s6 = ssub.s32 1, %s4
  %s7 = scalar_select 0, %s6, %s4
  loop: start=0, step=1, limit=4
  $region2: #{dnn_forward.1} parent=0 // loop_pre_header
    _
  $region3: #{dnn_forward.1} parent=0 // loop_header
    %s9 = sphi 0, %s13
    %p10 = scmp.ge.s32.totalorder %s9, 4
    %s19 = sphi 0, %s21
    %s22 = sphi 0, %s19
    %s23 = sphi 0, %s22
    %s39 = sphi 0, %s23
    %s43 = sphi 0, %s43
    %s45 = sphi 0, %s43
    %s46 = sphi 0, %s45
    %s60 = sphi 0, %s46
    %s64 = sphi 0, %s64
    %s66 = sphi 0, %s64
    %s67 = sphi 0, %s66
    %s81 = sphi 0, %s67
    %s87 = sphi 0, %s89
    %s90 = sphi 0, %s87
    %s91 = sphi 0, %s90
    %s107 = sphi 0, %s91
  $region4: #{dnn_forward.1} parent=0 // loop_header_branch
    %12 = sbr.rel (%p10) target = $region8
  $region5: #{dnn_forward.1} parent=0 // loop_body
    %s14 = ssub.s32 %s9, 1
    %s15 = ssub.s32 %s9, 2
    %s16 = sadd.s32 %s9, 1
    %s17 = ssub.s32 %s9, %s16
    %p18 = scmp.eq.s32.totalorder %s17, 0
    %s20 = sadd.s32 %s19, 1
    %s21 = scalar_select %p18, %s19, %s20
    %p24 = pneg %p18
    %p25 = scmp.eq.s32.totalorder %s9, 1
    %p26 = por %p24, %p25
    %p27 = scmp.ne.s32.totalorder %s19, %s22
    %p28 = scmp.eq.s32.totalorder %s9, 0
    %p29 = por %p27, %p28
    %p30 = scmp.ne.s32.totalorder %s19, %s22
    %p31 = scmp.eq.s32.totalorder %s14, 1
    %p32 = por %p30, %p31
    %p33 = scmp.ne.s32.totalorder %s22, %s23
    %p34 = scmp.eq.s32.totalorder %s14, 0
    %p35 = por %p33, %p34
    %p36 = scmp.ne.s32.totalorder %s22, %s23
    %p37 = scmp.eq.s32.totalorder %s15, 1
    %p38 = por %p36, %p37
    %p40 = scmp.ne.s32.totalorder %s23, %s39
    %p41 = scmp.eq.s32.totalorder %s15, 0
    %p42 = por %p40, %p41
    %s44 = sadd.s32 %s43, 1
    %p47 = scmp.eq.s32.totalorder %s9, 1
    %p48 = scmp.ne.s32.totalorder %s43, %s45
    %p49 = scmp.eq.s32.totalorder %s9, 0
    %p50 = por %p48, %p49
    %p51 = scmp.ne.s32.totalorder %s43, %s45
    %p52 = scmp.eq.s32.totalorder %s14, 1
    %p53 = por %p51, %p52
    %p54 = scmp.ne.s32.totalorder %s45, %s46
    %p55 = scmp.eq.s32.totalorder %s14, 0
    %p56 = por %p54, %p55
    %p57 = scmp.ne.s32.totalorder %s45, %s46
    %p58 = scmp.eq.s32.totalorder %s15, 1
    %p59 = por %p57, %p58
    %p61 = scmp.ne.s32.totalorder %s46, %s60
    %p62 = scmp.eq.s32.totalorder %s15, 0
    %p63 = por %p61, %p62
    %s65 = sadd.s32 %s64, 1
    %p68 = scmp.eq.s32.totalorder %s9, 1
    %p69 = scmp.ne.s32.totalorder %s64, %s66
    %p70 = scmp.eq.s32.totalorder %s9, 0
    %p71 = por %p69, %p70
    %p72 = scmp.ne.s32.totalorder %s64, %s66
    %p73 = scmp.eq.s32.totalorder %s14, 1
    %p74 = por %p72, %p73
    %p75 = scmp.ne.s32.totalorder %s66, %s67
    %p76 = scmp.eq.s32.totalorder %s14, 0
    %p77 = por %p75, %p76
    %p78 = scmp.ne.s32.totalorder %s66, %s67
    %p79 = scmp.eq.s32.totalorder %s15, 1
    %p80 = por %p78, %p79
    %p82 = scmp.ne.s32.totalorder %s67, %s81
    %p83 = scmp.eq.s32.totalorder %s15, 0
    %p84 = por %p82, %p83
    %s85 = ssub.s32 %s9, %s16
    %p86 = scmp.eq.s32.totalorder %s85, 0
    %s88 = sadd.s32 %s87, 1
    %s89 = scalar_select %p86, %s87, %s88
    %p92 = pneg %p86
    %p93 = scmp.eq.s32.totalorder %s9, 1
    %p94 = por %p92, %p93
    %p95 = scmp.ne.s32.totalorder %s87, %s90
    %p96 = scmp.eq.s32.totalorder %s9, 0
    %p97 = por %p95, %p96
    %p98 = scmp.ne.s32.totalorder %s87, %s90
    %p99 = scmp.eq.s32.totalorder %s14, 1
    %p100 = por %p98, %p99
    %p101 = scmp.ne.s32.totalorder %s90, %s91
    %p102 = scmp.eq.s32.totalorder %s14, 0
    %p103 = por %p101, %p102
    %p104 = scmp.ne.s32.totalorder %s90, %s91
    %p105 = scmp.eq.s32.totalorder %s15, 1
    %p106 = por %p104, %p105
    %p108 = scmp.ne.s32.totalorder %s91, %s107
    %p109 = scmp.eq.s32.totalorder %s15, 0
    %p110 = por %p108, %p109
    %p111 = scmp.le.s32.totalorder 1, %s9
    %p112 = scmp.lt.s32.totalorder %s9, 3
    %p113 = pnand %p111, %p112
    %p114 = pneg %p113
    // Predicated region
    $region9: #{dnn_forward.1} parent=5 // pred_check
      _
    $region10: #{dnn_forward.1} parent=5 // pred_check_branch
      %116 = sbr.rel (%p113) target = $region12
    $region11: #{dnn_forward.1} parent=5 // pred_region
      %s117 = ssub.s32 %s9, 1
      // Predicated region
      $region13: #{dnn_forward.1} parent=11 // pred_check
        %p118 = pneg %p56
      $region14: #{dnn_forward.1} parent=11 // pred_check_branch
        %120 = sbr.rel (%p118) target = $region16
      $region15: #{dnn_forward.1} parent=11 // pred_region
        _
      $region16: #{dnn_forward.1} parent=11 // pred_fallthru
        _
      // Predicated region
      $region17: #{dnn_forward.1} parent=11 // pred_check
        %p121 = pneg %p77
      $region18: #{dnn_forward.1} parent=11 // pred_check_branch
        %123 = sbr.rel (%p121) target = $region20
      $region19: #{dnn_forward.1} parent=11 // pred_region
        _
      $region20: #{dnn_forward.1} parent=11 // pred_fallthru
        _
    $region12: #{dnn_forward.1} parent=5 // pred_fallthru
      _
    %p124 = scmp.lt.s32.totalorder %s9, 2
    // Predicated region
    $region21: #{dnn_forward.1} parent=5 // pred_check
      %p125 = pneg %p124
    $region22: #{dnn_forward.1} parent=5 // pred_check_branch
      %127 = sbr.rel (%p125) target = $region24
    $region23: #{dnn_forward.1} parent=5 // pred_region
      // Predicated region
      $region25: #{dnn_forward.1} parent=23 // pred_check
        %p128 = pneg %p29
      $region26: #{dnn_forward.1} parent=23 // pred_check_branch
        %130 = sbr.rel (%p128) target = $region28
      $region27: #{dnn_forward.1} parent=23 // pred_region
        %p131 = scmp.lt.s32.totalorder %s9, 1
        %s132 = scalar_select %p131, %s9, 1
        %s133 = smul.addr %s132, 8
        %s134 = scalar_lea.vmem %s0, %s133
      $region28: #{dnn_forward.1} parent=23 // pred_fallthru
        _
    $region24: #{dnn_forward.1} parent=5 // pred_fallthru
      _
    %p135 = scmp.le.s32.totalorder 1, %s9
    %p136 = scmp.lt.s32.totalorder %s9, 3
    %p137 = pnand %p135, %p136
    %p138 = pneg %p137
    // Predicated region
    $region29: #{dnn_forward.1} parent=5 // pred_check
      _
    $region30: #{dnn_forward.1} parent=5 // pred_check_branch
      %140 = sbr.rel (%p137) target = $region32
    $region31: #{dnn_forward.1} parent=5 // pred_region
      %s141 = ssub.s32 %s9, 1
      %p142 = scmp.lt.s32.totalorder %s14, 1
      %s143 = scalar_select %p142, %s14, 1
      %s144 = smul.addr %s143, 8
      %s145 = scalar_lea.vmem %s0, %s144
      %p146 = pneg %p35
      %p147 = pneg %p32
      %p148 = pneg %p56
      %p149 = pneg %p53
      %p150 = pneg %p77
      %p151 = pneg %p74
      %p152 = pneg %p103
      %p153 = pneg %p100
      %p154 = scmp.lt.s32.totalorder %s14, 1
      %s155 = scalar_select %p154, %s14, 1
      %s156 = smul.addr %s155, 8
      %s157 = scalar_lea.vmem %s3, %s156
      %p158 = scmp.lt.s32.totalorder %s14, 1
      %s159 = scalar_select %p158, %s14, 1
      %s160 = smul.addr %s159, 8
      %s161 = scalar_lea.vmem %s0, %s160
      %p162 = scmp.lt.s32.totalorder %s14, 1
      %s163 = scalar_select %p162, %s14, 1
      %s164 = smul.addr %s163, 8
      %s165 = scalar_lea.vmem %s3, %s164
      %v166 = vld [vmem:[%s161] sm:$0x1]
      %v167 = vperm.slane %v166, 0
      %v168 = vld [vmem:[%s1] sm:$0xff]
      %v169 = vld [vmem:[%s1 + $0x8] sm:$0xff]
      %v170 = vld [vmem:[%s1 + $0x10] sm:$0xff]
      %v171 = vld [vmem:[%s1 + $0x18] sm:$0xff]
      %v172 = vld [vmem:[%s1 + $0x20] sm:$0xff]
      %v173 = vld [vmem:[%s1 + $0x28] sm:$0xff]
      %v174 = vld [vmem:[%s1 + $0x30] sm:$0xff]
      %v175 = vld [vmem:[%s1 + $0x38] sm:$0xff]
      %177 = vset.pattern.permute.xlu0 0
      %178 = vperm.xlu0 %177, %v168
      %v179 = vpop.permute.xlu0 %178
      %182 = vset.pattern.permute.xlu0 0
      %183 = vperm.xlu0 %182, %v169
      %v184 = vpop.permute.xlu0 %183
      %187 = vset.pattern.permute.xlu0 0
      %188 = vperm.xlu0 %187, %v170
      %v189 = vpop.permute.xlu0 %188
      %192 = vset.pattern.permute.xlu0 0
      %193 = vperm.xlu0 %192, %v171
      %v194 = vpop.permute.xlu0 %193
      %197 = vset.pattern.permute.xlu0 0
      %198 = vperm.xlu0 %197, %v172
      %v199 = vpop.permute.xlu0 %198
      %202 = vset.pattern.permute.xlu0 0
      %203 = vperm.xlu0 %202, %v173
      %v204 = vpop.permute.xlu0 %203
      %207 = vset.pattern.permute.xlu0 0
      %208 = vperm.xlu0 %207, %v174
      %v209 = vpop.permute.xlu0 %208
      %212 = vset.pattern.permute.xlu0 0
      %213 = vperm.xlu0 %212, %v175
      %v214 = vpop.permute.xlu0 %213
      %v216 = vmul.f32 %v179, %v167
      %v217 = vmul.f32 %v184, %v167
      %v218 = vmul.f32 %v189, %v167
      %v219 = vmul.f32 %v194, %v167
      %v220 = vmul.f32 %v199, %v167
      %v221 = vmul.f32 %v204, %v167
      %v222 = vmul.f32 %v209, %v167
      %v223 = vmul.f32 %v214, %v167
      %v224 = vld [vmem:[%s2] sm:$0xff]
      %v225 = vld [vmem:[%s2 + $0x8] sm:$0xff]
      %v226 = vld [vmem:[%s2 + $0x10] sm:$0xff]
      %v227 = vld [vmem:[%s2 + $0x18] sm:$0xff]
      %v228 = vld [vmem:[%s2 + $0x20] sm:$0xff]
      %v229 = vld [vmem:[%s2 + $0x28] sm:$0xff]
      %v230 = vld [vmem:[%s2 + $0x30] sm:$0xff]
      %v231 = vld [vmem:[%s2 + $0x38] sm:$0xff]
      %233 = vset.pattern.permute.xlu0 0
      %234 = vperm.xlu0 %233, %v224
      %v235 = vpop.permute.xlu0 %234
      %238 = vset.pattern.permute.xlu0 0
      %239 = vperm.xlu0 %238, %v225
      %v240 = vpop.permute.xlu0 %239
      %243 = vset.pattern.permute.xlu0 0
      %244 = vperm.xlu0 %243, %v226
      %v245 = vpop.permute.xlu0 %244
      %248 = vset.pattern.permute.xlu0 0
      %249 = vperm.xlu0 %248, %v227
      %v250 = vpop.permute.xlu0 %249
      %253 = vset.pattern.permute.xlu0 0
      %254 = vperm.xlu0 %253, %v228
      %v255 = vpop.permute.xlu0 %254
      %258 = vset.pattern.permute.xlu0 0
      %259 = vperm.xlu0 %258, %v229
      %v260 = vpop.permute.xlu0 %259
      %263 = vset.pattern.permute.xlu0 0
      %264 = vperm.xlu0 %263, %v230
      %v265 = vpop.permute.xlu0 %264
      %268 = vset.pattern.permute.xlu0 0
      %269 = vperm.xlu0 %268, %v231
      %v270 = vpop.permute.xlu0 %269
      %v272 = vadd.f32 %v216, %v235
      %v273 = vadd.f32 %v217, %v240
      %v274 = vadd.f32 %v218, %v245
      %v275 = vadd.f32 %v219, %v250
      %v276 = vadd.f32 %v220, %v255
      %v277 = vadd.f32 %v221, %v260
      %v278 = vadd.f32 %v222, %v265
      %v279 = vadd.f32 %v223, %v270
      %v280 = vtanh.pop %v272
      %v281 = vtanh.pop %v273
      %v282 = vtanh.pop %v274
      %v283 = vtanh.pop %v275
      %v284 = vtanh.pop %v276
      %v285 = vtanh.pop %v277
      %v286 = vtanh.pop %v278
      %v287 = vtanh.pop %v279
      %s288 = scalar_lea.vmem %s1, 64
      %v289 = vld [vmem:[%s288] sm:$0xff]
      %v290 = vld [vmem:[%s288 + $0x8] sm:$0xff]
      %v291 = vld [vmem:[%s288 + $0x10] sm:$0xff]
      %v292 = vld [vmem:[%s288 + $0x18] sm:$0xff]
      %v293 = vld [vmem:[%s288 + $0x20] sm:$0xff]
      %v294 = vld [vmem:[%s288 + $0x28] sm:$0xff]
      %v295 = vld [vmem:[%s288 + $0x30] sm:$0xff]
      %v296 = vld [vmem:[%s288 + $0x38] sm:$0xff]
      %s297 = scalar_lea.vmem %s2, 64
      %v298 = vld [vmem:[%s297] sm:$0xff]
      %v299 = vld [vmem:[%s297 + $0x8] sm:$0xff]
      %v300 = vld [vmem:[%s297 + $0x10] sm:$0xff]
      %v301 = vld [vmem:[%s297 + $0x18] sm:$0xff]
      %v302 = vld [vmem:[%s297 + $0x20] sm:$0xff]
      %v303 = vld [vmem:[%s297 + $0x28] sm:$0xff]
      %v304 = vld [vmem:[%s297 + $0x30] sm:$0xff]
      %v305 = vld [vmem:[%s297 + $0x38] sm:$0xff]
      %307 = vset.pattern.permute.xlu0 0
      %308 = vperm.xlu0 %307, %v298
      %v309 = vpop.permute.xlu0 %308
      %312 = vset.pattern.permute.xlu0 0
      %313 = vperm.xlu0 %312, %v299
      %v314 = vpop.permute.xlu0 %313
      %317 = vset.pattern.permute.xlu0 0
      %318 = vperm.xlu0 %317, %v300
      %v319 = vpop.permute.xlu0 %318
      %322 = vset.pattern.permute.xlu0 0
      %323 = vperm.xlu0 %322, %v301
      %v324 = vpop.permute.xlu0 %323
      %327 = vset.pattern.permute.xlu0 0
      %328 = vperm.xlu0 %327, %v302
      %v329 = vpop.permute.xlu0 %328
      %332 = vset.pattern.permute.xlu0 0
      %333 = vperm.xlu0 %332, %v303
      %v334 = vpop.permute.xlu0 %333
      %337 = vset.pattern.permute.xlu0 0
      %338 = vperm.xlu0 %337, %v304
      %v339 = vpop.permute.xlu0 %338
      %342 = vset.pattern.permute.xlu0 0
      %343 = vperm.xlu0 %342, %v305
      %v344 = vpop.permute.xlu0 %343
      %vm346 = vcmask 523264
      %v348 = vsel %vm346, %v289, 0
      %v351 = vsel %vm346, %v290, 0
      %v354 = vsel %vm346, %v291, 0
      %v357 = vsel %vm346, %v292, 0
      %v360 = vsel %vm346, %v293, 0
      %v363 = vsel %vm346, %v294, 0
      %v366 = vsel %vm346, %v295, 0
      %v369 = vsel %vm346, %v296, 0
      %371 = vmatpush.msra.mxu0 0.0
      %372 = vmatpush.msra.mxu0 0.0
      %373 = vmatpush.msra.mxu0 0.0
      %374 = vmatpush.msra.mxu0 0.0
      %375 = vmatpush.msra.mxu0 0.0
      %376 = vmatpush.msra.mxu0 0.0
      %377 = vmatpush.msra.mxu0 0.0
      %378 = vmatpush.msra.mxu0 0.0
      %379 = vmatpush.msra.mxu0 %v287
      %380 = vmatpush.msra.mxu0 %v286
      %381 = vmatpush.msra.mxu0 %v285
      %382 = vmatpush.msra.mxu0 %v284
      %383 = vmatpush.msra.mxu0 %v283
      %384 = vmatpush.msra.mxu0 %v282
      %385 = vmatpush.msra.mxu0 %v281
      %386 = vmatpush.msra.mxu0 %v280
      %387 = vmatmul.f32.gmra.mxu0 %v348
      %v388 = vpop.f32.mrf.mxu0
      %v389 = vadd.f32 %v309, %v388
      %390 = vmatmul.f32.gmra.mxu0 %v351
      %v391 = vpop.f32.mrf.mxu0
      %v392 = vadd.f32 %v314, %v391
      %393 = vmatmul.f32.gmra.mxu0 %v354
      %v394 = vpop.f32.mrf.mxu0
      %v395 = vadd.f32 %v319, %v394
      %396 = vmatmul.f32.gmra.mxu0 %v357
      %v397 = vpop.f32.mrf.mxu0
      %v398 = vadd.f32 %v324, %v397
      %399 = vmatmul.f32.gmra.mxu0 %v360
      %v400 = vpop.f32.mrf.mxu0
      %v401 = vadd.f32 %v329, %v400
      %402 = vmatmul.f32.gmra.mxu0 %v363
      %v403 = vpop.f32.mrf.mxu0
      %v404 = vadd.f32 %v334, %v403
      %405 = vmatmul.f32.gmra.mxu0 %v366
      %v406 = vpop.f32.mrf.mxu0
      %v407 = vadd.f32 %v339, %v406
      %408 = vmatmul.f32.gmra.mxu0 %v369
      %v409 = vpop.f32.mrf.mxu0
      %v410 = vadd.f32 %v344, %v409
      %411 = vdwg.mxu0
      %v412 = vtanh.pop %v389
      %v413 = vtanh.pop %v392
      %v414 = vtanh.pop %v395
      %v415 = vtanh.pop %v398
      %v416 = vtanh.pop %v401
      %v417 = vtanh.pop %v404
      %v418 = vtanh.pop %v407
      %v419 = vtanh.pop %v410
      %s420 = scalar_lea.vmem %s1, 128
      %v421 = vld [vmem:[%s420] sm:$0xff]
      %v422 = vld [vmem:[%s420 + $0x8] sm:$0xff]
      %v423 = vld [vmem:[%s420 + $0x10] sm:$0xff]
      %v424 = vld [vmem:[%s420 + $0x18] sm:$0xff]
      %v425 = vld [vmem:[%s420 + $0x20] sm:$0xff]
      %v426 = vld [vmem:[%s420 + $0x28] sm:$0xff]
      %v427 = vld [vmem:[%s420 + $0x30] sm:$0xff]
      %v428 = vld [vmem:[%s420 + $0x38] sm:$0xff]
      %s429 = scalar_lea.vmem %s2, 128
      %v430 = vld [vmem:[%s429] sm:$0xff]
      %v431 = vld [vmem:[%s429 + $0x8] sm:$0xff]
      %v432 = vld [vmem:[%s429 + $0x10] sm:$0xff]
      %v433 = vld [vmem:[%s429 + $0x18] sm:$0xff]
      %v434 = vld [vmem:[%s429 + $0x20] sm:$0xff]
      %v435 = vld [vmem:[%s429 + $0x28] sm:$0xff]
      %v436 = vld [vmem:[%s429 + $0x30] sm:$0xff]
      %v437 = vld [vmem:[%s429 + $0x38] sm:$0xff]
      %439 = vset.pattern.permute.xlu0 0
      %440 = vperm.xlu0 %439, %v430
      %v441 = vpop.permute.xlu0 %440
      %444 = vset.pattern.permute.xlu0 0
      %445 = vperm.xlu0 %444, %v431
      %v446 = vpop.permute.xlu0 %445
      %449 = vset.pattern.permute.xlu0 0
      %450 = vperm.xlu0 %449, %v432
      %v451 = vpop.permute.xlu0 %450
      %454 = vset.pattern.permute.xlu0 0
      %455 = vperm.xlu0 %454, %v433
      %v456 = vpop.permute.xlu0 %455
      %459 = vset.pattern.permute.xlu0 0
      %460 = vperm.xlu0 %459, %v434
      %v461 = vpop.permute.xlu0 %460
      %464 = vset.pattern.permute.xlu0 0
      %465 = vperm.xlu0 %464, %v435
      %v466 = vpop.permute.xlu0 %465
      %469 = vset.pattern.permute.xlu0 0
      %470 = vperm.xlu0 %469, %v436
      %v471 = vpop.permute.xlu0 %470
      %474 = vset.pattern.permute.xlu0 0
      %475 = vperm.xlu0 %474, %v437
      %v476 = vpop.permute.xlu0 %475
      %v479 = vsel %vm346, %v421, 0
      %v482 = vsel %vm346, %v422, 0
      %v485 = vsel %vm346, %v423, 0
      %v488 = vsel %vm346, %v424, 0
      %v491 = vsel %vm346, %v425, 0
      %v494 = vsel %vm346, %v426, 0
      %v497 = vsel %vm346, %v427, 0
      %v500 = vsel %vm346, %v428, 0
      %502 = vmatpush.msra.mxu0 0.0
      %503 = vmatpush.msra.mxu0 0.0
      %504 = vmatpush.msra.mxu0 0.0
      %505 = vmatpush.msra.mxu0 0.0
      %506 = vmatpush.msra.mxu0 0.0
      %507 = vmatpush.msra.mxu0 0.0
      %508 = vmatpush.msra.mxu0 0.0
      %509 = vmatpush.msra.mxu0 0.0
      %510 = vmatpush.msra.mxu0 %v419
      %511 = vmatpush.msra.mxu0 %v418
      %512 = vmatpush.msra.mxu0 %v417
      %513 = vmatpush.msra.mxu0 %v416
      %514 = vmatpush.msra.mxu0 %v415
      %515 = vmatpush.msra.mxu0 %v414
      %516 = vmatpush.msra.mxu0 %v413
      %517 = vmatpush.msra.mxu0 %v412
      %518 = vmatmul.f32.gmra.mxu0 %v479
      %v519 = vpop.f32.mrf.mxu0
      %v520 = vadd.f32 %v441, %v519
      %521 = vmatmul.f32.gmra.mxu0 %v482
      %v522 = vpop.f32.mrf.mxu0
      %v523 = vadd.f32 %v446, %v522
      %524 = vmatmul.f32.gmra.mxu0 %v485
      %v525 = vpop.f32.mrf.mxu0
      %v526 = vadd.f32 %v451, %v525
      %527 = vmatmul.f32.gmra.mxu0 %v488
      %v528 = vpop.f32.mrf.mxu0
      %v529 = vadd.f32 %v456, %v528
      %530 = vmatmul.f32.gmra.mxu0 %v491
      %v531 = vpop.f32.mrf.mxu0
      %v532 = vadd.f32 %v461, %v531
      %533 = vmatmul.f32.gmra.mxu0 %v494
      %v534 = vpop.f32.mrf.mxu0
      %v535 = vadd.f32 %v466, %v534
      %536 = vmatmul.f32.gmra.mxu0 %v497
      %v537 = vpop.f32.mrf.mxu0
      %v538 = vadd.f32 %v471, %v537
      %539 = vmatmul.f32.gmra.mxu0 %v500
      %v540 = vpop.f32.mrf.mxu0
      %v541 = vadd.f32 %v476, %v540
      %542 = vdwg.mxu0
      %v543 = vtanh.pop %v520
      %v544 = vtanh.pop %v523
      %v545 = vtanh.pop %v526
      %v546 = vtanh.pop %v529
      %v547 = vtanh.pop %v532
      %v548 = vtanh.pop %v535
      %v549 = vtanh.pop %v538
      %v550 = vtanh.pop %v541
      %s551 = scalar_lea.vmem %s1, 192
      %v552 = vld [vmem:[%s551] sm:$0xff]
      %v553 = vld [vmem:[%s551 + $0x8] sm:$0xff]
      %v554 = vld [vmem:[%s551 + $0x10] sm:$0xff]
      %v555 = vld [vmem:[%s551 + $0x18] sm:$0xff]
      %v556 = vld [vmem:[%s551 + $0x20] sm:$0xff]
      %v557 = vld [vmem:[%s551 + $0x28] sm:$0xff]
      %v558 = vld [vmem:[%s551 + $0x30] sm:$0xff]
      %v559 = vld [vmem:[%s551 + $0x38] sm:$0xff]
      %s560 = scalar_lea.vmem %s2, 192
      %v561 = vld [vmem:[%s560] sm:$0xff]
      %v562 = vld [vmem:[%s560 + $0x8] sm:$0xff]
      %v563 = vld [vmem:[%s560 + $0x10] sm:$0xff]
      %v564 = vld [vmem:[%s560 + $0x18] sm:$0xff]
      %v565 = vld [vmem:[%s560 + $0x20] sm:$0xff]
      %v566 = vld [vmem:[%s560 + $0x28] sm:$0xff]
      %v567 = vld [vmem:[%s560 + $0x30] sm:$0xff]
      %v568 = vld [vmem:[%s560 + $0x38] sm:$0xff]
      %570 = vset.pattern.permute.xlu0 0
      %571 = vperm.xlu0 %570, %v561
      %v572 = vpop.permute.xlu0 %571
      %575 = vset.pattern.permute.xlu0 0
      %576 = vperm.xlu0 %575, %v562
      %v577 = vpop.permute.xlu0 %576
      %580 = vset.pattern.permute.xlu0 0
      %581 = vperm.xlu0 %580, %v563
      %v582 = vpop.permute.xlu0 %581
      %585 = vset.pattern.permute.xlu0 0
      %586 = vperm.xlu0 %585, %v564
      %v587 = vpop.permute.xlu0 %586
      %590 = vset.pattern.permute.xlu0 0
      %591 = vperm.xlu0 %590, %v565
      %v592 = vpop.permute.xlu0 %591
      %595 = vset.pattern.permute.xlu0 0
      %596 = vperm.xlu0 %595, %v566
      %v597 = vpop.permute.xlu0 %596
      %600 = vset.pattern.permute.xlu0 0
      %601 = vperm.xlu0 %600, %v567
      %v602 = vpop.permute.xlu0 %601
      %605 = vset.pattern.permute.xlu0 0
      %606 = vperm.xlu0 %605, %v568
      %v607 = vpop.permute.xlu0 %606
      %v610 = vsel %vm346, %v552, 0
      %v613 = vsel %vm346, %v553, 0
      %v616 = vsel %vm346, %v554, 0
      %v619 = vsel %vm346, %v555, 0
      %v622 = vsel %vm346, %v556, 0
      %v625 = vsel %vm346, %v557, 0
      %v628 = vsel %vm346, %v558, 0
      %v631 = vsel %vm346, %v559, 0
      %633 = vmatpush.msra.mxu0 0.0
      %634 = vmatpush.msra.mxu0 0.0
      %635 = vmatpush.msra.mxu0 0.0
      %636 = vmatpush.msra.mxu0 0.0
      %637 = vmatpush.msra.mxu0 0.0
      %638 = vmatpush.msra.mxu0 0.0
      %639 = vmatpush.msra.mxu0 0.0
      %640 = vmatpush.msra.mxu0 0.0
      %641 = vmatpush.msra.mxu0 %v550
      %642 = vmatpush.msra.mxu0 %v549
      %643 = vmatpush.msra.mxu0 %v548
      %644 = vmatpush.msra.mxu0 %v547
      %645 = vmatpush.msra.mxu0 %v546
      %646 = vmatpush.msra.mxu0 %v545
      %647 = vmatpush.msra.mxu0 %v544
      %648 = vmatpush.msra.mxu0 %v543
      %649 = vmatmul.f32.gmra.mxu0 %v610
      %v650 = vpop.f32.mrf.mxu0
      %v651 = vadd.f32 %v572, %v650
      %652 = vmatmul.f32.gmra.mxu0 %v613
      %v653 = vpop.f32.mrf.mxu0
      %v654 = vadd.f32 %v577, %v653
      %655 = vmatmul.f32.gmra.mxu0 %v616
      %v656 = vpop.f32.mrf.mxu0
      %v657 = vadd.f32 %v582, %v656
      %658 = vmatmul.f32.gmra.mxu0 %v619
      %v659 = vpop.f32.mrf.mxu0
      %v660 = vadd.f32 %v587, %v659
      %661 = vmatmul.f32.gmra.mxu0 %v622
      %v662 = vpop.f32.mrf.mxu0
      %v663 = vadd.f32 %v592, %v662
      %664 = vmatmul.f32.gmra.mxu0 %v625
      %v665 = vpop.f32.mrf.mxu0
      %v666 = vadd.f32 %v597, %v665
      %667 = vmatmul.f32.gmra.mxu0 %v628
      %v668 = vpop.f32.mrf.mxu0
      %v669 = vadd.f32 %v602, %v668
      %670 = vmatmul.f32.gmra.mxu0 %v631
      %v671 = vpop.f32.mrf.mxu0
      %v672 = vadd.f32 %v607, %v671
      %673 = vdwg.mxu0
      %v674 = vtanh.pop %v651
      %v675 = vtanh.pop %v654
      %v676 = vtanh.pop %v657
      %v677 = vtanh.pop %v660
      %v678 = vtanh.pop %v663
      %v679 = vtanh.pop %v666
      %v680 = vtanh.pop %v669
      %v681 = vtanh.pop %v672
      %s682 = scalar_lea.vmem %s1, 256
      %v683 = vld [vmem:[%s682] sm:$0xff]
      %v684 = vld [vmem:[%s682 + $0x8] sm:$0xff]
      %v685 = vld [vmem:[%s682 + $0x10] sm:$0xff]
      %v686 = vld [vmem:[%s682 + $0x18] sm:$0xff]
      %v687 = vld [vmem:[%s682 + $0x20] sm:$0xff]
      %v688 = vld [vmem:[%s682 + $0x28] sm:$0xff]
      %v689 = vld [vmem:[%s682 + $0x30] sm:$0xff]
      %v690 = vld [vmem:[%s682 + $0x38] sm:$0xff]
      %s691 = scalar_lea.vmem %s2, 256
      %v692 = vld [vmem:[%s691] sm:$0xff]
      %v693 = vld [vmem:[%s691 + $0x8] sm:$0xff]
      %v694 = vld [vmem:[%s691 + $0x10] sm:$0xff]
      %v695 = vld [vmem:[%s691 + $0x18] sm:$0xff]
      %v696 = vld [vmem:[%s691 + $0x20] sm:$0xff]
      %v697 = vld [vmem:[%s691 + $0x28] sm:$0xff]
      %v698 = vld [vmem:[%s691 + $0x30] sm:$0xff]
      %v699 = vld [vmem:[%s691 + $0x38] sm:$0xff]
      %701 = vset.pattern.permute.xlu0 0
      %702 = vperm.xlu0 %701, %v692
      %v703 = vpop.permute.xlu0 %702
      %706 = vset.pattern.permute.xlu0 0
      %707 = vperm.xlu0 %706, %v693
      %v708 = vpop.permute.xlu0 %707
      %711 = vset.pattern.permute.xlu0 0
      %712 = vperm.xlu0 %711, %v694
      %v713 = vpop.permute.xlu0 %712
      %716 = vset.pattern.permute.xlu0 0
      %717 = vperm.xlu0 %716, %v695
      %v718 = vpop.permute.xlu0 %717
      %721 = vset.pattern.permute.xlu0 0
      %722 = vperm.xlu0 %721, %v696
      %v723 = vpop.permute.xlu0 %722
      %726 = vset.pattern.permute.xlu0 0
      %727 = vperm.xlu0 %726, %v697
      %v728 = vpop.permute.xlu0 %727
      %731 = vset.pattern.permute.xlu0 0
      %732 = vperm.xlu0 %731, %v698
      %v733 = vpop.permute.xlu0 %732
      %736 = vset.pattern.permute.xlu0 0
      %737 = vperm.xlu0 %736, %v699
      %v738 = vpop.permute.xlu0 %737
      %v741 = vsel %vm346, %v683, 0
      %v744 = vsel %vm346, %v684, 0
      %v747 = vsel %vm346, %v685, 0
      %v750 = vsel %vm346, %v686, 0
      %v753 = vsel %vm346, %v687, 0
      %v756 = vsel %vm346, %v688, 0
      %v759 = vsel %vm346, %v689, 0
      %v762 = vsel %vm346, %v690, 0
      %764 = vmatpush.msra.mxu0 0.0
      %765 = vmatpush.msra.mxu0 0.0
      %766 = vmatpush.msra.mxu0 0.0
      %767 = vmatpush.msra.mxu0 0.0
      %768 = vmatpush.msra.mxu0 0.0
      %769 = vmatpush.msra.mxu0 0.0
      %770 = vmatpush.msra.mxu0 0.0
      %771 = vmatpush.msra.mxu0 0.0
      %772 = vmatpush.msra.mxu0 %v681
      %773 = vmatpush.msra.mxu0 %v680
      %774 = vmatpush.msra.mxu0 %v679
      %775 = vmatpush.msra.mxu0 %v678
      %776 = vmatpush.msra.mxu0 %v677
      %777 = vmatpush.msra.mxu0 %v676
      %778 = vmatpush.msra.mxu0 %v675
      %779 = vmatpush.msra.mxu0 %v674
      %780 = vmatmul.f32.gmra.mxu0 %v741
      %v781 = vpop.f32.mrf.mxu0
      %v782 = vadd.f32 %v703, %v781
      %783 = vmatmul.f32.gmra.mxu0 %v744
      %v784 = vpop.f32.mrf.mxu0
      %v785 = vadd.f32 %v708, %v784
      %786 = vmatmul.f32.gmra.mxu0 %v747
      %v787 = vpop.f32.mrf.mxu0
      %v788 = vadd.f32 %v713, %v787
      %789 = vmatmul.f32.gmra.mxu0 %v750
      %v790 = vpop.f32.mrf.mxu0
      %v791 = vadd.f32 %v718, %v790
      %792 = vmatmul.f32.gmra.mxu0 %v753
      %v793 = vpop.f32.mrf.mxu0
      %v794 = vadd.f32 %v723, %v793
      %795 = vmatmul.f32.gmra.mxu0 %v756
      %v796 = vpop.f32.mrf.mxu0
      %v797 = vadd.f32 %v728, %v796
      %798 = vmatmul.f32.gmra.mxu0 %v759
      %v799 = vpop.f32.mrf.mxu0
      %v800 = vadd.f32 %v733, %v799
      %801 = vmatmul.f32.gmra.mxu0 %v762
      %v802 = vpop.f32.mrf.mxu0
      %v803 = vadd.f32 %v738, %v802
      %804 = vdwg.mxu0
      %v805 = vtanh.pop %v782
      %v806 = vtanh.pop %v785
      %v807 = vtanh.pop %v788
      %v808 = vtanh.pop %v791
      %v809 = vtanh.pop %v794
      %v810 = vtanh.pop %v797
      %v811 = vtanh.pop %v800
      %v812 = vtanh.pop %v803
      %s813 = scalar_lea.vmem %s1, 320
      %v814 = vld [vmem:[%s813] sm:$0xff]
      %v815 = vld [vmem:[%s813 + $0x8] sm:$0xff]
      %v816 = vld [vmem:[%s813 + $0x10] sm:$0xff]
      %v817 = vld [vmem:[%s813 + $0x18] sm:$0xff]
      %v818 = vld [vmem:[%s813 + $0x20] sm:$0xff]
      %v819 = vld [vmem:[%s813 + $0x28] sm:$0xff]
      %v820 = vld [vmem:[%s813 + $0x30] sm:$0xff]
      %v821 = vld [vmem:[%s813 + $0x38] sm:$0xff]
      %s822 = scalar_lea.vmem %s2, 320
      %v823 = vld [vmem:[%s822] sm:$0xff]
      %v824 = vld [vmem:[%s822 + $0x8] sm:$0xff]
      %v825 = vld [vmem:[%s822 + $0x10] sm:$0xff]
      %v826 = vld [vmem:[%s822 + $0x18] sm:$0xff]
      %v827 = vld [vmem:[%s822 + $0x20] sm:$0xff]
      %v828 = vld [vmem:[%s822 + $0x28] sm:$0xff]
      %v829 = vld [vmem:[%s822 + $0x30] sm:$0xff]
      %v830 = vld [vmem:[%s822 + $0x38] sm:$0xff]
      %832 = vset.pattern.permute.xlu0 0
      %833 = vperm.xlu0 %832, %v823
      %v834 = vpop.permute.xlu0 %833
      %837 = vset.pattern.permute.xlu0 0
      %838 = vperm.xlu0 %837, %v824
      %v839 = vpop.permute.xlu0 %838
      %842 = vset.pattern.permute.xlu0 0
      %843 = vperm.xlu0 %842, %v825
      %v844 = vpop.permute.xlu0 %843
      %847 = vset.pattern.permute.xlu0 0
      %848 = vperm.xlu0 %847, %v826
      %v849 = vpop.permute.xlu0 %848
      %852 = vset.pattern.permute.xlu0 0
      %853 = vperm.xlu0 %852, %v827
      %v854 = vpop.permute.xlu0 %853
      %857 = vset.pattern.permute.xlu0 0
      %858 = vperm.xlu0 %857, %v828
      %v859 = vpop.permute.xlu0 %858
      %862 = vset.pattern.permute.xlu0 0
      %863 = vperm.xlu0 %862, %v829
      %v864 = vpop.permute.xlu0 %863
      %867 = vset.pattern.permute.xlu0 0
      %868 = vperm.xlu0 %867, %v830
      %v869 = vpop.permute.xlu0 %868
      %v872 = vsel %vm346, %v814, 0
      %v875 = vsel %vm346, %v815, 0
      %v878 = vsel %vm346, %v816, 0
      %v881 = vsel %vm346, %v817, 0
      %v884 = vsel %vm346, %v818, 0
      %v887 = vsel %vm346, %v819, 0
      %v890 = vsel %vm346, %v820, 0
      %v893 = vsel %vm346, %v821, 0
      %895 = vmatpush.msra.mxu0 0.0
      %896 = vmatpush.msra.mxu0 0.0
      %897 = vmatpush.msra.mxu0 0.0
      %898 = vmatpush.msra.mxu0 0.0
      %899 = vmatpush.msra.mxu0 0.0
      %900 = vmatpush.msra.mxu0 0.0
      %901 = vmatpush.msra.mxu0 0.0
      %902 = vmatpush.msra.mxu0 0.0
      %903 = vmatpush.msra.mxu0 %v812
      %904 = vmatpush.msra.mxu0 %v811
      %905 = vmatpush.msra.mxu0 %v810
      %906 = vmatpush.msra.mxu0 %v809
      %907 = vmatpush.msra.mxu0 %v808
      %908 = vmatpush.msra.mxu0 %v807
      %909 = vmatpush.msra.mxu0 %v806
      %910 = vmatpush.msra.mxu0 %v805
      %911 = vmatmul.f32.gmra.mxu0 %v872
      %v912 = vpop.f32.mrf.mxu0
      %v913 = vadd.f32 %v834, %v912
      %914 = vmatmul.f32.gmra.mxu0 %v875
      %v915 = vpop.f32.mrf.mxu0
      %v916 = vadd.f32 %v839, %v915
      %917 = vmatmul.f32.gmra.mxu0 %v878
      %v918 = vpop.f32.mrf.mxu0
      %v919 = vadd.f32 %v844, %v918
      %920 = vmatmul.f32.gmra.mxu0 %v881
      %v921 = vpop.f32.mrf.mxu0
      %v922 = vadd.f32 %v849, %v921
      %923 = vmatmul.f32.gmra.mxu0 %v884
      %v924 = vpop.f32.mrf.mxu0
      %v925 = vadd.f32 %v854, %v924
      %926 = vmatmul.f32.gmra.mxu0 %v887
      %v927 = vpop.f32.mrf.mxu0
      %v928 = vadd.f32 %v859, %v927
      %929 = vmatmul.f32.gmra.mxu0 %v890
      %v930 = vpop.f32.mrf.mxu0
      %v931 = vadd.f32 %v864, %v930
      %932 = vmatmul.f32.gmra.mxu0 %v893
      %v933 = vpop.f32.mrf.mxu0
      %v934 = vadd.f32 %v869, %v933
      %935 = vdwg.mxu0
      %v936 = vtanh.pop %v913
      %v937 = vtanh.pop %v916
      %v938 = vtanh.pop %v919
      %v939 = vtanh.pop %v922
      %v940 = vtanh.pop %v925
      %v941 = vtanh.pop %v928
      %v942 = vtanh.pop %v931
      %v943 = vtanh.pop %v934
      %s944 = scalar_lea.vmem %s1, 384
      %v945 = vld [vmem:[%s944] sm:$0xff]
      %v946 = vld [vmem:[%s944 + $0x8] sm:$0xff]
      %v947 = vld [vmem:[%s944 + $0x10] sm:$0xff]
      %v948 = vld [vmem:[%s944 + $0x18] sm:$0xff]
      %v949 = vld [vmem:[%s944 + $0x20] sm:$0xff]
      %v950 = vld [vmem:[%s944 + $0x28] sm:$0xff]
      %v951 = vld [vmem:[%s944 + $0x30] sm:$0xff]
      %v952 = vld [vmem:[%s944 + $0x38] sm:$0xff]
      %s953 = scalar_lea.vmem %s2, 384
      %v954 = vld [vmem:[%s953] sm:$0xff]
      %v955 = vld [vmem:[%s953 + $0x8] sm:$0xff]
      %v956 = vld [vmem:[%s953 + $0x10] sm:$0xff]
      %v957 = vld [vmem:[%s953 + $0x18] sm:$0xff]
      %v958 = vld [vmem:[%s953 + $0x20] sm:$0xff]
      %v959 = vld [vmem:[%s953 + $0x28] sm:$0xff]
      %v960 = vld [vmem:[%s953 + $0x30] sm:$0xff]
      %v961 = vld [vmem:[%s953 + $0x38] sm:$0xff]
      %963 = vset.pattern.permute.xlu0 0
      %964 = vperm.xlu0 %963, %v954
      %v965 = vpop.permute.xlu0 %964
      %968 = vset.pattern.permute.xlu0 0
      %969 = vperm.xlu0 %968, %v955
      %v970 = vpop.permute.xlu0 %969
      %973 = vset.pattern.permute.xlu0 0
      %974 = vperm.xlu0 %973, %v956
      %v975 = vpop.permute.xlu0 %974
      %978 = vset.pattern.permute.xlu0 0
      %979 = vperm.xlu0 %978, %v957
      %v980 = vpop.permute.xlu0 %979
      %983 = vset.pattern.permute.xlu0 0
      %984 = vperm.xlu0 %983, %v958
      %v985 = vpop.permute.xlu0 %984
      %988 = vset.pattern.permute.xlu0 0
      %989 = vperm.xlu0 %988, %v959
      %v990 = vpop.permute.xlu0 %989
      %993 = vset.pattern.permute.xlu0 0
      %994 = vperm.xlu0 %993, %v960
      %v995 = vpop.permute.xlu0 %994
      %998 = vset.pattern.permute.xlu0 0
      %999 = vperm.xlu0 %998, %v961
      %v1000 = vpop.permute.xlu0 %999
      %v1003 = vsel %vm346, %v945, 0
      %v1006 = vsel %vm346, %v946, 0
      %v1009 = vsel %vm346, %v947, 0
      %v1012 = vsel %vm346, %v948, 0
      %v1015 = vsel %vm346, %v949, 0
      %v1018 = vsel %vm346, %v950, 0
      %v1021 = vsel %vm346, %v951, 0
      %v1024 = vsel %vm346, %v952, 0
      %1026 = vmatpush.msra.mxu0 0.0
      %1027 = vmatpush.msra.mxu0 0.0
      %1028 = vmatpush.msra.mxu0 0.0
      %1029 = vmatpush.msra.mxu0 0.0
      %1030 = vmatpush.msra.mxu0 0.0
      %1031 = vmatpush.msra.mxu0 0.0
      %1032 = vmatpush.msra.mxu0 0.0
      %1033 = vmatpush.msra.mxu0 0.0
      %1034 = vmatpush.msra.mxu0 %v943
      %1035 = vmatpush.msra.mxu0 %v942
      %1036 = vmatpush.msra.mxu0 %v941
      %1037 = vmatpush.msra.mxu0 %v940
      %1038 = vmatpush.msra.mxu0 %v939
      %1039 = vmatpush.msra.mxu0 %v938
      %1040 = vmatpush.msra.mxu0 %v937
      %1041 = vmatpush.msra.mxu0 %v936
      %1042 = vmatmul.f32.gmra.mxu0 %v1003
      %v1043 = vpop.f32.mrf.mxu0
      %v1044 = vadd.f32 %v965, %v1043
      %1045 = vmatmul.f32.gmra.mxu0 %v1006
      %v1046 = vpop.f32.mrf.mxu0
      %v1047 = vadd.f32 %v970, %v1046
      %1048 = vmatmul.f32.gmra.mxu0 %v1009
      %v1049 = vpop.f32.mrf.mxu0
      %v1050 = vadd.f32 %v975, %v1049
      %1051 = vmatmul.f32.gmra.mxu0 %v1012
      %v1052 = vpop.f32.mrf.mxu0
      %v1053 = vadd.f32 %v980, %v1052
      %1054 = vmatmul.f32.gmra.mxu0 %v1015
      %v1055 = vpop.f32.mrf.mxu0
      %v1056 = vadd.f32 %v985, %v1055
      %1057 = vmatmul.f32.gmra.mxu0 %v1018
      %v1058 = vpop.f32.mrf.mxu0
      %v1059 = vadd.f32 %v990, %v1058
      %1060 = vmatmul.f32.gmra.mxu0 %v1021
      %v1061 = vpop.f32.mrf.mxu0
      %v1062 = vadd.f32 %v995, %v1061
      %1063 = vmatmul.f32.gmra.mxu0 %v1024
      %v1064 = vpop.f32.mrf.mxu0
      %v1065 = vadd.f32 %v1000, %v1064
      %1066 = vdwg.mxu0
      %v1067 = vtanh.pop %v1044
      %v1068 = vtanh.pop %v1047
      %v1069 = vtanh.pop %v1050
      %v1070 = vtanh.pop %v1053
      %v1071 = vtanh.pop %v1056
      %v1072 = vtanh.pop %v1059
      %v1073 = vtanh.pop %v1062
      %v1074 = vtanh.pop %v1065
      %s1075 = scalar_lea.vmem %s1, 448
      %v1076 = vld [vmem:[%s1075] sm:$0xff]
      %v1077 = vld [vmem:[%s1075 + $0x8] sm:$0xff]
      %v1078 = vld [vmem:[%s1075 + $0x10] sm:$0xff]
      %v1079 = vld [vmem:[%s1075 + $0x18] sm:$0xff]
      %v1080 = vld [vmem:[%s1075 + $0x20] sm:$0xff]
      %v1081 = vld [vmem:[%s1075 + $0x28] sm:$0xff]
      %v1082 = vld [vmem:[%s1075 + $0x30] sm:$0xff]
      %v1083 = vld [vmem:[%s1075 + $0x38] sm:$0xff]
      %s1084 = scalar_lea.vmem %s2, 448
      %v1085 = vld [vmem:[%s1084] sm:$0xff]
      %v1086 = vld [vmem:[%s1084 + $0x8] sm:$0xff]
      %v1087 = vld [vmem:[%s1084 + $0x10] sm:$0xff]
      %v1088 = vld [vmem:[%s1084 + $0x18] sm:$0xff]
      %v1089 = vld [vmem:[%s1084 + $0x20] sm:$0xff]
      %v1090 = vld [vmem:[%s1084 + $0x28] sm:$0xff]
      %v1091 = vld [vmem:[%s1084 + $0x30] sm:$0xff]
      %v1092 = vld [vmem:[%s1084 + $0x38] sm:$0xff]
      %1094 = vset.pattern.permute.xlu0 0
      %1095 = vperm.xlu0 %1094, %v1085
      %v1096 = vpop.permute.xlu0 %1095
      %1099 = vset.pattern.permute.xlu0 0
      %1100 = vperm.xlu0 %1099, %v1086
      %v1101 = vpop.permute.xlu0 %1100
      %1104 = vset.pattern.permute.xlu0 0
      %1105 = vperm.xlu0 %1104, %v1087
      %v1106 = vpop.permute.xlu0 %1105
      %1109 = vset.pattern.permute.xlu0 0
      %1110 = vperm.xlu0 %1109, %v1088
      %v1111 = vpop.permute.xlu0 %1110
      %1114 = vset.pattern.permute.xlu0 0
      %1115 = vperm.xlu0 %1114, %v1089
      %v1116 = vpop.permute.xlu0 %1115
      %1119 = vset.pattern.permute.xlu0 0
      %1120 = vperm.xlu0 %1119, %v1090
      %v1121 = vpop.permute.xlu0 %1120
      %1124 = vset.pattern.permute.xlu0 0
      %1125 = vperm.xlu0 %1124, %v1091
      %v1126 = vpop.permute.xlu0 %1125
      %1129 = vset.pattern.permute.xlu0 0
      %1130 = vperm.xlu0 %1129, %v1092
      %v1131 = vpop.permute.xlu0 %1130
      %v1134 = vsel %vm346, %v1076, 0
      %v1137 = vsel %vm346, %v1077, 0
      %v1140 = vsel %vm346, %v1078, 0
      %v1143 = vsel %vm346, %v1079, 0
      %v1146 = vsel %vm346, %v1080, 0
      %v1149 = vsel %vm346, %v1081, 0
      %v1152 = vsel %vm346, %v1082, 0
      %v1155 = vsel %vm346, %v1083, 0
      %1157 = vmatpush.msra.mxu0 0.0
      %1158 = vmatpush.msra.mxu0 0.0
      %1159 = vmatpush.msra.mxu0 0.0
      %1160 = vmatpush.msra.mxu0 0.0
      %1161 = vmatpush.msra.mxu0 0.0
      %1162 = vmatpush.msra.mxu0 0.0
      %1163 = vmatpush.msra.mxu0 0.0
      %1164 = vmatpush.msra.mxu0 0.0
      %1165 = vmatpush.msra.mxu0 %v1074
      %1166 = vmatpush.msra.mxu0 %v1073
      %1167 = vmatpush.msra.mxu0 %v1072
      %1168 = vmatpush.msra.mxu0 %v1071
      %1169 = vmatpush.msra.mxu0 %v1070
      %1170 = vmatpush.msra.mxu0 %v1069
      %1171 = vmatpush.msra.mxu0 %v1068
      %1172 = vmatpush.msra.mxu0 %v1067
      %1173 = vmatmul.f32.gmra.mxu0 %v1134
      %v1174 = vpop.f32.mrf.mxu0
      %v1175 = vadd.f32 %v1096, %v1174
      %1176 = vmatmul.f32.gmra.mxu0 %v1137
      %v1177 = vpop.f32.mrf.mxu0
      %v1178 = vadd.f32 %v1101, %v1177
      %1179 = vmatmul.f32.gmra.mxu0 %v1140
      %v1180 = vpop.f32.mrf.mxu0
      %v1181 = vadd.f32 %v1106, %v1180
      %1182 = vmatmul.f32.gmra.mxu0 %v1143
      %v1183 = vpop.f32.mrf.mxu0
      %v1184 = vadd.f32 %v1111, %v1183
      %1185 = vmatmul.f32.gmra.mxu0 %v1146
      %v1186 = vpop.f32.mrf.mxu0
      %v1187 = vadd.f32 %v1116, %v1186
      %1188 = vmatmul.f32.gmra.mxu0 %v1149
      %v1189 = vpop.f32.mrf.mxu0
      %v1190 = vadd.f32 %v1121, %v1189
      %1191 = vmatmul.f32.gmra.mxu0 %v1152
      %v1192 = vpop.f32.mrf.mxu0
      %v1193 = vadd.f32 %v1126, %v1192
      %1194 = vmatmul.f32.gmra.mxu0 %v1155
      %v1195 = vpop.f32.mrf.mxu0
      %v1196 = vadd.f32 %v1131, %v1195
      %1197 = vdwg.mxu0
      %v1198 = vtanh.pop %v1175
      %v1199 = vtanh.pop %v1178
      %v1200 = vtanh.pop %v1181
      %v1201 = vtanh.pop %v1184
      %v1202 = vtanh.pop %v1187
      %v1203 = vtanh.pop %v1190
      %v1204 = vtanh.pop %v1193
      %v1205 = vtanh.pop %v1196
      %s1206 = scalar_lea.vmem %s1, 512
      %v1207 = vld [vmem:[%s1206] sm:$0xff]
      %v1208 = vld [vmem:[%s1206 + $0x8] sm:$0xff]
      %v1209 = vld [vmem:[%s1206 + $0x10] sm:$0xff]
      %v1210 = vld [vmem:[%s1206 + $0x18] sm:$0xff]
      %v1211 = vld [vmem:[%s1206 + $0x20] sm:$0xff]
      %v1212 = vld [vmem:[%s1206 + $0x28] sm:$0xff]
      %v1213 = vld [vmem:[%s1206 + $0x30] sm:$0xff]
      %v1214 = vld [vmem:[%s1206 + $0x38] sm:$0xff]
      %s1215 = scalar_lea.vmem %s2, 512
      %v1216 = vld [vmem:[%s1215] sm:$0xff]
      %v1217 = vld [vmem:[%s1215 + $0x8] sm:$0xff]
      %v1218 = vld [vmem:[%s1215 + $0x10] sm:$0xff]
      %v1219 = vld [vmem:[%s1215 + $0x18] sm:$0xff]
      %v1220 = vld [vmem:[%s1215 + $0x20] sm:$0xff]
      %v1221 = vld [vmem:[%s1215 + $0x28] sm:$0xff]
      %v1222 = vld [vmem:[%s1215 + $0x30] sm:$0xff]
      %v1223 = vld [vmem:[%s1215 + $0x38] sm:$0xff]
      %1225 = vset.pattern.permute.xlu0 0
      %1226 = vperm.xlu0 %1225, %v1216
      %v1227 = vpop.permute.xlu0 %1226
      %1230 = vset.pattern.permute.xlu0 0
      %1231 = vperm.xlu0 %1230, %v1217
      %v1232 = vpop.permute.xlu0 %1231
      %1235 = vset.pattern.permute.xlu0 0
      %1236 = vperm.xlu0 %1235, %v1218
      %v1237 = vpop.permute.xlu0 %1236
      %1240 = vset.pattern.permute.xlu0 0
      %1241 = vperm.xlu0 %1240, %v1219
      %v1242 = vpop.permute.xlu0 %1241
      %1245 = vset.pattern.permute.xlu0 0
      %1246 = vperm.xlu0 %1245, %v1220
      %v1247 = vpop.permute.xlu0 %1246
      %1250 = vset.pattern.permute.xlu0 0
      %1251 = vperm.xlu0 %1250, %v1221
      %v1252 = vpop.permute.xlu0 %1251
      %1255 = vset.pattern.permute.xlu0 0
      %1256 = vperm.xlu0 %1255, %v1222
      %v1257 = vpop.permute.xlu0 %1256
      %1260 = vset.pattern.permute.xlu0 0
      %1261 = vperm.xlu0 %1260, %v1223
      %v1262 = vpop.permute.xlu0 %1261
      %v1265 = vsel %vm346, %v1207, 0
      %v1268 = vsel %vm346, %v1208, 0
      %v1271 = vsel %vm346, %v1209, 0
      %v1274 = vsel %vm346, %v1210, 0
      %v1277 = vsel %vm346, %v1211, 0
      %v1280 = vsel %vm346, %v1212, 0
      %v1283 = vsel %vm346, %v1213, 0
      %v1286 = vsel %vm346, %v1214, 0
      %1288 = vmatpush.msra.mxu0 0.0
      %1289 = vmatpush.msra.mxu0 0.0
      %1290 = vmatpush.msra.mxu0 0.0
      %1291 = vmatpush.msra.mxu0 0.0
      %1292 = vmatpush.msra.mxu0 0.0
      %1293 = vmatpush.msra.mxu0 0.0
      %1294 = vmatpush.msra.mxu0 0.0
      %1295 = vmatpush.msra.mxu0 0.0
      %1296 = vmatpush.msra.mxu0 %v1205
      %1297 = vmatpush.msra.mxu0 %v1204
      %1298 = vmatpush.msra.mxu0 %v1203
      %1299 = vmatpush.msra.mxu0 %v1202
      %1300 = vmatpush.msra.mxu0 %v1201
      %1301 = vmatpush.msra.mxu0 %v1200
      %1302 = vmatpush.msra.mxu0 %v1199
      %1303 = vmatpush.msra.mxu0 %v1198
      %1304 = vmatmul.f32.gmra.mxu0 %v1265
      %v1305 = vpop.f32.mrf.mxu0
      %v1306 = vadd.f32 %v1227, %v1305
      %1307 = vmatmul.f32.gmra.mxu0 %v1268
      %v1308 = vpop.f32.mrf.mxu0
      %v1309 = vadd.f32 %v1232, %v1308
      %1310 = vmatmul.f32.gmra.mxu0 %v1271
      %v1311 = vpop.f32.mrf.mxu0
      %v1312 = vadd.f32 %v1237, %v1311
      %1313 = vmatmul.f32.gmra.mxu0 %v1274
      %v1314 = vpop.f32.mrf.mxu0
      %v1315 = vadd.f32 %v1242, %v1314
      %1316 = vmatmul.f32.gmra.mxu0 %v1277
      %v1317 = vpop.f32.mrf.mxu0
      %v1318 = vadd.f32 %v1247, %v1317
      %1319 = vmatmul.f32.gmra.mxu0 %v1280
      %v1320 = vpop.f32.mrf.mxu0
      %v1321 = vadd.f32 %v1252, %v1320
      %1322 = vmatmul.f32.gmra.mxu0 %v1283
      %v1323 = vpop.f32.mrf.mxu0
      %v1324 = vadd.f32 %v1257, %v1323
      %1325 = vmatmul.f32.gmra.mxu0 %v1286
      %v1326 = vpop.f32.mrf.mxu0
      %v1327 = vadd.f32 %v1262, %v1326
      %1328 = vdwg.mxu0
      %v1329 = vtanh.pop %v1306
      %v1330 = vtanh.pop %v1309
      %v1331 = vtanh.pop %v1312
      %v1332 = vtanh.pop %v1315
      %v1333 = vtanh.pop %v1318
      %v1334 = vtanh.pop %v1321
      %v1335 = vtanh.pop %v1324
      %v1336 = vtanh.pop %v1327
      %s1337 = scalar_lea.vmem %s1, 576
      %v1338 = vld [vmem:[%s1337] sm:$0xff]
      %v1339 = vld [vmem:[%s1337 + $0x8] sm:$0xff]
      %v1340 = vld [vmem:[%s1337 + $0x10] sm:$0xff]
      %v1341 = vld [vmem:[%s1337 + $0x18] sm:$0xff]
      %v1342 = vld [vmem:[%s1337 + $0x20] sm:$0xff]
      %v1343 = vld [vmem:[%s1337 + $0x28] sm:$0xff]
      %v1344 = vld [vmem:[%s1337 + $0x30] sm:$0xff]
      %v1345 = vld [vmem:[%s1337 + $0x38] sm:$0xff]
      %s1346 = scalar_lea.vmem %s2, 576
      %v1347 = vld [vmem:[%s1346] sm:$0xff]
      %v1348 = vld [vmem:[%s1346 + $0x8] sm:$0xff]
      %v1349 = vld [vmem:[%s1346 + $0x10] sm:$0xff]
      %v1350 = vld [vmem:[%s1346 + $0x18] sm:$0xff]
      %v1351 = vld [vmem:[%s1346 + $0x20] sm:$0xff]
      %v1352 = vld [vmem:[%s1346 + $0x28] sm:$0xff]
      %v1353 = vld [vmem:[%s1346 + $0x30] sm:$0xff]
      %v1354 = vld [vmem:[%s1346 + $0x38] sm:$0xff]
      %1356 = vset.pattern.permute.xlu0 0
      %1357 = vperm.xlu0 %1356, %v1347
      %v1358 = vpop.permute.xlu0 %1357
      %1361 = vset.pattern.permute.xlu0 0
      %1362 = vperm.xlu0 %1361, %v1348
      %v1363 = vpop.permute.xlu0 %1362
      %1366 = vset.pattern.permute.xlu0 0
      %1367 = vperm.xlu0 %1366, %v1349
      %v1368 = vpop.permute.xlu0 %1367
      %1371 = vset.pattern.permute.xlu0 0
      %1372 = vperm.xlu0 %1371, %v1350
      %v1373 = vpop.permute.xlu0 %1372
      %1376 = vset.pattern.permute.xlu0 0
      %1377 = vperm.xlu0 %1376, %v1351
      %v1378 = vpop.permute.xlu0 %1377
      %1381 = vset.pattern.permute.xlu0 0
      %1382 = vperm.xlu0 %1381, %v1352
      %v1383 = vpop.permute.xlu0 %1382
      %1386 = vset.pattern.permute.xlu0 0
      %1387 = vperm.xlu0 %1386, %v1353
      %v1388 = vpop.permute.xlu0 %1387
      %1391 = vset.pattern.permute.xlu0 0
      %1392 = vperm.xlu0 %1391, %v1354
      %v1393 = vpop.permute.xlu0 %1392
      %v1396 = vsel %vm346, %v1338, 0
      %v1399 = vsel %vm346, %v1339, 0
      %v1402 = vsel %vm346, %v1340, 0
      %v1405 = vsel %vm346, %v1341, 0
      %v1408 = vsel %vm346, %v1342, 0
      %v1411 = vsel %vm346, %v1343, 0
      %v1414 = vsel %vm346, %v1344, 0
      %v1417 = vsel %vm346, %v1345, 0
      %1419 = vmatpush.msra.mxu0 0.0
      %1420 = vmatpush.msra.mxu0 0.0
      %1421 = vmatpush.msra.mxu0 0.0
      %1422 = vmatpush.msra.mxu0 0.0
      %1423 = vmatpush.msra.mxu0 0.0
      %1424 = vmatpush.msra.mxu0 0.0
      %1425 = vmatpush.msra.mxu0 0.0
      %1426 = vmatpush.msra.mxu0 0.0
      %1427 = vmatpush.msra.mxu0 %v1336
      %1428 = vmatpush.msra.mxu0 %v1335
      %1429 = vmatpush.msra.mxu0 %v1334
      %1430 = vmatpush.msra.mxu0 %v1333
      %1431 = vmatpush.msra.mxu0 %v1332
      %1432 = vmatpush.msra.mxu0 %v1331
      %1433 = vmatpush.msra.mxu0 %v1330
      %1434 = vmatpush.msra.mxu0 %v1329
      %1435 = vmatmul.f32.gmra.mxu0 %v1396
      %v1436 = vpop.f32.mrf.mxu0
      %v1437 = vadd.f32 %v1358, %v1436
      %1438 = vmatmul.f32.gmra.mxu0 %v1399
      %v1439 = vpop.f32.mrf.mxu0
      %v1440 = vadd.f32 %v1363, %v1439
      %1441 = vmatmul.f32.gmra.mxu0 %v1402
      %v1442 = vpop.f32.mrf.mxu0
      %v1443 = vadd.f32 %v1368, %v1442
      %1444 = vmatmul.f32.gmra.mxu0 %v1405
      %v1445 = vpop.f32.mrf.mxu0
      %v1446 = vadd.f32 %v1373, %v1445
      %1447 = vmatmul.f32.gmra.mxu0 %v1408
      %v1448 = vpop.f32.mrf.mxu0
      %v1449 = vadd.f32 %v1378, %v1448
      %1450 = vmatmul.f32.gmra.mxu0 %v1411
      %v1451 = vpop.f32.mrf.mxu0
      %v1452 = vadd.f32 %v1383, %v1451
      %1453 = vmatmul.f32.gmra.mxu0 %v1414
      %v1454 = vpop.f32.mrf.mxu0
      %v1455 = vadd.f32 %v1388, %v1454
      %1456 = vmatmul.f32.gmra.mxu0 %v1417
      %v1457 = vpop.f32.mrf.mxu0
      %v1458 = vadd.f32 %v1393, %v1457
      %1459 = vdwg.mxu0
      %v1460 = vtanh.pop %v1437
      %v1461 = vtanh.pop %v1440
      %v1462 = vtanh.pop %v1443
      %v1463 = vtanh.pop %v1446
      %v1464 = vtanh.pop %v1449
      %v1465 = vtanh.pop %v1452
      %v1466 = vtanh.pop %v1455
      %v1467 = vtanh.pop %v1458
      %s1468 = scalar_lea.vmem %s1, 640
      %v1469 = vld [vmem:[%s1468] sm:$0xff]
      %v1470 = vld [vmem:[%s1468 + $0x8] sm:$0xff]
      %v1471 = vld [vmem:[%s1468 + $0x10] sm:$0xff]
      %v1472 = vld [vmem:[%s1468 + $0x18] sm:$0xff]
      %v1473 = vld [vmem:[%s1468 + $0x20] sm:$0xff]
      %v1474 = vld [vmem:[%s1468 + $0x28] sm:$0xff]
      %v1475 = vld [vmem:[%s1468 + $0x30] sm:$0xff]
      %v1476 = vld [vmem:[%s1468 + $0x38] sm:$0xff]
      %s1477 = scalar_lea.vmem %s2, 640
      %v1478 = vld [vmem:[%s1477] sm:$0xff]
      %v1479 = vld [vmem:[%s1477 + $0x8] sm:$0xff]
      %v1480 = vld [vmem:[%s1477 + $0x10] sm:$0xff]
      %v1481 = vld [vmem:[%s1477 + $0x18] sm:$0xff]
      %v1482 = vld [vmem:[%s1477 + $0x20] sm:$0xff]
      %v1483 = vld [vmem:[%s1477 + $0x28] sm:$0xff]
      %v1484 = vld [vmem:[%s1477 + $0x30] sm:$0xff]
      %v1485 = vld [vmem:[%s1477 + $0x38] sm:$0xff]
      %1487 = vset.pattern.permute.xlu0 0
      %1488 = vperm.xlu0 %1487, %v1478
      %v1489 = vpop.permute.xlu0 %1488
      %1492 = vset.pattern.permute.xlu0 0
      %1493 = vperm.xlu0 %1492, %v1479
      %v1494 = vpop.permute.xlu0 %1493
      %1497 = vset.pattern.permute.xlu0 0
      %1498 = vperm.xlu0 %1497, %v1480
      %v1499 = vpop.permute.xlu0 %1498
      %1502 = vset.pattern.permute.xlu0 0
      %1503 = vperm.xlu0 %1502, %v1481
      %v1504 = vpop.permute.xlu0 %1503
      %1507 = vset.pattern.permute.xlu0 0
      %1508 = vperm.xlu0 %1507, %v1482
      %v1509 = vpop.permute.xlu0 %1508
      %1512 = vset.pattern.permute.xlu0 0
      %1513 = vperm.xlu0 %1512, %v1483
      %v1514 = vpop.permute.xlu0 %1513
      %1517 = vset.pattern.permute.xlu0 0
      %1518 = vperm.xlu0 %1517, %v1484
      %v1519 = vpop.permute.xlu0 %1518
      %1522 = vset.pattern.permute.xlu0 0
      %1523 = vperm.xlu0 %1522, %v1485
      %v1524 = vpop.permute.xlu0 %1523
      %v1527 = vsel %vm346, %v1469, 0
      %v1530 = vsel %vm346, %v1470, 0
      %v1533 = vsel %vm346, %v1471, 0
      %v1536 = vsel %vm346, %v1472, 0
      %v1539 = vsel %vm346, %v1473, 0
      %v1542 = vsel %vm346, %v1474, 0
      %v1545 = vsel %vm346, %v1475, 0
      %v1548 = vsel %vm346, %v1476, 0
      %1550 = vmatpush.msra.mxu0 0.0
      %1551 = vmatpush.msra.mxu0 0.0
      %1552 = vmatpush.msra.mxu0 0.0
      %1553 = vmatpush.msra.mxu0 0.0
      %1554 = vmatpush.msra.mxu0 0.0
      %1555 = vmatpush.msra.mxu0 0.0
      %1556 = vmatpush.msra.mxu0 0.0
      %1557 = vmatpush.msra.mxu0 0.0
      %1558 = vmatpush.msra.mxu0 %v1467
      %1559 = vmatpush.msra.mxu0 %v1466
      %1560 = vmatpush.msra.mxu0 %v1465
      %1561 = vmatpush.msra.mxu0 %v1464
      %1562 = vmatpush.msra.mxu0 %v1463
      %1563 = vmatpush.msra.mxu0 %v1462
      %1564 = vmatpush.msra.mxu0 %v1461
      %1565 = vmatpush.msra.mxu0 %v1460
      %1566 = vmatmul.f32.gmra.mxu0 %v1527
      %v1567 = vpop.f32.mrf.mxu0
      %v1568 = vadd.f32 %v1489, %v1567
      %1569 = vmatmul.f32.gmra.mxu0 %v1530
      %v1570 = vpop.f32.mrf.mxu0
      %v1571 = vadd.f32 %v1494, %v1570
      %1572 = vmatmul.f32.gmra.mxu0 %v1533
      %v1573 = vpop.f32.mrf.mxu0
      %v1574 = vadd.f32 %v1499, %v1573
      %1575 = vmatmul.f32.gmra.mxu0 %v1536
      %v1576 = vpop.f32.mrf.mxu0
      %v1577 = vadd.f32 %v1504, %v1576
      %1578 = vmatmul.f32.gmra.mxu0 %v1539
      %v1579 = vpop.f32.mrf.mxu0
      %v1580 = vadd.f32 %v1509, %v1579
      %1581 = vmatmul.f32.gmra.mxu0 %v1542
      %v1582 = vpop.f32.mrf.mxu0
      %v1583 = vadd.f32 %v1514, %v1582
      %1584 = vmatmul.f32.gmra.mxu0 %v1545
      %v1585 = vpop.f32.mrf.mxu0
      %v1586 = vadd.f32 %v1519, %v1585
      %1587 = vmatmul.f32.gmra.mxu0 %v1548
      %v1588 = vpop.f32.mrf.mxu0
      %v1589 = vadd.f32 %v1524, %v1588
      %1590 = vdwg.mxu0
      %v1591 = vtanh.pop %v1568
      %v1592 = vtanh.pop %v1571
      %v1593 = vtanh.pop %v1574
      %v1594 = vtanh.pop %v1577
      %v1595 = vtanh.pop %v1580
      %v1596 = vtanh.pop %v1583
      %v1597 = vtanh.pop %v1586
      %v1598 = vtanh.pop %v1589
      %s1599 = scalar_lea.vmem %s1, 704
      %v1600 = vld [vmem:[%s1599] sm:$0xff]
      %v1601 = vld [vmem:[%s1599 + $0x8] sm:$0xff]
      %v1602 = vld [vmem:[%s1599 + $0x10] sm:$0xff]
      %v1603 = vld [vmem:[%s1599 + $0x18] sm:$0xff]
      %v1604 = vld [vmem:[%s1599 + $0x20] sm:$0xff]
      %v1605 = vld [vmem:[%s1599 + $0x28] sm:$0xff]
      %v1606 = vld [vmem:[%s1599 + $0x30] sm:$0xff]
      %v1607 = vld [vmem:[%s1599 + $0x38] sm:$0xff]
      %s1608 = scalar_lea.vmem %s2, 704
      %v1609 = vld [vmem:[%s1608] sm:$0xff]
      %v1610 = vld [vmem:[%s1608 + $0x8] sm:$0xff]
      %v1611 = vld [vmem:[%s1608 + $0x10] sm:$0xff]
      %v1612 = vld [vmem:[%s1608 + $0x18] sm:$0xff]
      %v1613 = vld [vmem:[%s1608 + $0x20] sm:$0xff]
      %v1614 = vld [vmem:[%s1608 + $0x28] sm:$0xff]
      %v1615 = vld [vmem:[%s1608 + $0x30] sm:$0xff]
      %v1616 = vld [vmem:[%s1608 + $0x38] sm:$0xff]
      %1618 = vset.pattern.permute.xlu0 0
      %1619 = vperm.xlu0 %1618, %v1609
      %v1620 = vpop.permute.xlu0 %1619
      %1623 = vset.pattern.permute.xlu0 0
      %1624 = vperm.xlu0 %1623, %v1610
      %v1625 = vpop.permute.xlu0 %1624
      %1628 = vset.pattern.permute.xlu0 0
      %1629 = vperm.xlu0 %1628, %v1611
      %v1630 = vpop.permute.xlu0 %1629
      %1633 = vset.pattern.permute.xlu0 0
      %1634 = vperm.xlu0 %1633, %v1612
      %v1635 = vpop.permute.xlu0 %1634
      %1638 = vset.pattern.permute.xlu0 0
      %1639 = vperm.xlu0 %1638, %v1613
      %v1640 = vpop.permute.xlu0 %1639
      %1643 = vset.pattern.permute.xlu0 0
      %1644 = vperm.xlu0 %1643, %v1614
      %v1645 = vpop.permute.xlu0 %1644
      %1648 = vset.pattern.permute.xlu0 0
      %1649 = vperm.xlu0 %1648, %v1615
      %v1650 = vpop.permute.xlu0 %1649
      %1653 = vset.pattern.permute.xlu0 0
      %1654 = vperm.xlu0 %1653, %v1616
      %v1655 = vpop.permute.xlu0 %1654
      %v1658 = vsel %vm346, %v1600, 0
      %v1661 = vsel %vm346, %v1601, 0
      %v1664 = vsel %vm346, %v1602, 0
      %v1667 = vsel %vm346, %v1603, 0
      %v1670 = vsel %vm346, %v1604, 0
      %v1673 = vsel %vm346, %v1605, 0
      %v1676 = vsel %vm346, %v1606, 0
      %v1679 = vsel %vm346, %v1607, 0
      %1681 = vmatpush.msra.mxu0 0.0
      %1682 = vmatpush.msra.mxu0 0.0
      %1683 = vmatpush.msra.mxu0 0.0
      %1684 = vmatpush.msra.mxu0 0.0
      %1685 = vmatpush.msra.mxu0 0.0
      %1686 = vmatpush.msra.mxu0 0.0
      %1687 = vmatpush.msra.mxu0 0.0
      %1688 = vmatpush.msra.mxu0 0.0
      %1689 = vmatpush.msra.mxu0 %v1598
      %1690 = vmatpush.msra.mxu0 %v1597
      %1691 = vmatpush.msra.mxu0 %v1596
      %1692 = vmatpush.msra.mxu0 %v1595
      %1693 = vmatpush.msra.mxu0 %v1594
      %1694 = vmatpush.msra.mxu0 %v1593
      %1695 = vmatpush.msra.mxu0 %v1592
      %1696 = vmatpush.msra.mxu0 %v1591
      %1697 = vmatmul.f32.gmra.mxu0 %v1658
      %v1698 = vpop.f32.mrf.mxu0
      %v1699 = vadd.f32 %v1620, %v1698
      %1700 = vmatmul.f32.gmra.mxu0 %v1661
      %v1701 = vpop.f32.mrf.mxu0
      %v1702 = vadd.f32 %v1625, %v1701
      %1703 = vmatmul.f32.gmra.mxu0 %v1664
      %v1704 = vpop.f32.mrf.mxu0
      %v1705 = vadd.f32 %v1630, %v1704
      %1706 = vmatmul.f32.gmra.mxu0 %v1667
      %v1707 = vpop.f32.mrf.mxu0
      %v1708 = vadd.f32 %v1635, %v1707
      %1709 = vmatmul.f32.gmra.mxu0 %v1670
      %v1710 = vpop.f32.mrf.mxu0
      %v1711 = vadd.f32 %v1640, %v1710
      %1712 = vmatmul.f32.gmra.mxu0 %v1673
      %v1713 = vpop.f32.mrf.mxu0
      %v1714 = vadd.f32 %v1645, %v1713
      %1715 = vmatmul.f32.gmra.mxu0 %v1676
      %v1716 = vpop.f32.mrf.mxu0
      %v1717 = vadd.f32 %v1650, %v1716
      %1718 = vmatmul.f32.gmra.mxu0 %v1679
      %v1719 = vpop.f32.mrf.mxu0
      %v1720 = vadd.f32 %v1655, %v1719
      %1721 = vdwg.mxu0
      %v1722 = vtanh.pop %v1699
      %v1723 = vtanh.pop %v1702
      %v1724 = vtanh.pop %v1705
      %v1725 = vtanh.pop %v1708
      %v1726 = vtanh.pop %v1711
      %v1727 = vtanh.pop %v1714
      %v1728 = vtanh.pop %v1717
      %v1729 = vtanh.pop %v1720
      %s1730 = scalar_lea.vmem %s1, 768
      %v1731 = vld [vmem:[%s1730] sm:$0xff]
      %s1732 = scalar_lea.vmem %s2, 768
      %v1733 = vld [vmem:[%s1732] sm:$0xff]
      %1735 = vset.pattern.permute.xlu0 0
      %1736 = vperm.xlu0 %1735, %v1733
      %v1737 = vpop.permute.xlu0 %1736
      %v1740 = vsel %vm346, %v1731, 0
      %1742 = vmatpush.msra.mxu0 0.0
      %1743 = vmatpush.msra.mxu0 0.0
      %1744 = vmatpush.msra.mxu0 0.0
      %1745 = vmatpush.msra.mxu0 0.0
      %1746 = vmatpush.msra.mxu0 0.0
      %1747 = vmatpush.msra.mxu0 0.0
      %1748 = vmatpush.msra.mxu0 0.0
      %1749 = vmatpush.msra.mxu0 0.0
      %1750 = vmatpush.msra.mxu0 %v1729
      %1751 = vmatpush.msra.mxu0 %v1728
      %1752 = vmatpush.msra.mxu0 %v1727
      %1753 = vmatpush.msra.mxu0 %v1726
      %1754 = vmatpush.msra.mxu0 %v1725
      %1755 = vmatpush.msra.mxu0 %v1724
      %1756 = vmatpush.msra.mxu0 %v1723
      %1757 = vmatpush.msra.mxu0 %v1722
      %1758 = vmatmul.f32.gmra.mxu0 %v1740
      %v1759 = vpop.f32.mrf.mxu0
      %v1760 = vadd.f32 %v1737, %v1759
      %1761 = vdwg.mxu0
      %1762 = vst [vmem:[%s165] sm:$0xff] %v1760
      %p1763 = scmp.lt.s32.totalorder %s14, 1
      %s1764 = scalar_select %p1763, %s14, 1
      %s1765 = smul.addr %s1764, 8
      %s1766 = scalar_lea.vmem %s3, %s1765
      // Predicated region
      $region33: #{dnn_forward.1} parent=31 // pred_check
        %p1767 = pneg %p100
      $region34: #{dnn_forward.1} parent=31 // pred_check_branch
        %1769 = sbr.rel (%p1767) target = $region36
      $region35: #{dnn_forward.1} parent=31 // pred_region
        _
      $region36: #{dnn_forward.1} parent=31 // pred_fallthru
        _
    $region32: #{dnn_forward.1} parent=5 // pred_fallthru
      _
    %p1770 = scmp.le.s32.totalorder 2, %s9
    // Predicated region
    $region37: #{dnn_forward.1} parent=5 // pred_check
      %p1771 = pneg %p1770
    $region38: #{dnn_forward.1} parent=5 // pred_check_branch
      %1773 = sbr.rel (%p1771) target = $region40
    $region39: #{dnn_forward.1} parent=5 // pred_region
      %s1774 = ssub.s32 %s9, 2
      // Predicated region
      $region41: #{dnn_forward.1} parent=39 // pred_check
        %p1775 = pneg %p106
      $region42: #{dnn_forward.1} parent=39 // pred_check_branch
        %1777 = sbr.rel (%p1775) target = $region44
      $region43: #{dnn_forward.1} parent=39 // pred_region
        %p1778 = scmp.lt.s32.totalorder %s15, 1
        %s1779 = scalar_select %p1778, %s15, 1
        %s1780 = smul.addr %s1779, 8
        %s1781 = scalar_lea.vmem %s3, %s1780
      $region44: #{dnn_forward.1} parent=39 // pred_fallthru
        _
    $region40: #{dnn_forward.1} parent=5 // pred_fallthru
      _
  $region6: #{dnn_forward.1} parent=0 // loop_footer
    %s13 = sadd.s32 1, %s9
  $region7: #{dnn_forward.1} parent=0 // loop_footer_branch
    %8 = sbr.rel target = $region3
  $region8: #{dnn_forward.1} parent=0 // loop_exit
    _

</llo_original>
